<compile_context>
chip_gen: v7x
topology: tpu7x:2x2x1
jax: 0.10.0
libtpu: 0.0.40
codegen_flags: <defaults>
</compile_context>

<pallas_src>
import jax
import jax.numpy as jnp
from jax.experimental import pallas as pl
from jax.experimental.pallas import tpu as pltpu

# ---------------- problem sizes (small, consistent with the module) ----------
B = 2              # batch
CIN = 4            # in_channel
D = 8              # depth
H = W = 16         # spatial
HW = H * W         # 256
BHW = B * HW       # 512 lanes (batch folded into lanes)
SE_RED = 4         # SE reduction ratio (assumed)
DR = max(D // SE_RED, 1)

K9 = 9 * CIN                    # 36 rows per dilated-3x3 im2col block
ONES_ROW = CIN + 3 * K9         # 112: index of the constant-1 row
K1P = 120                       # stage-1 contraction depth (113 padded to 120)


# ------------------------------- kernel --------------------------------------
def hfsm_kernel(act_ref, w1_ref, w2_ref, se1_ref, se2_ref, bias_ref,
                out_ref, feat_ref):
    f32 = jnp.float32
    bf16 = jnp.bfloat16

    # per-image lane masks (hoisted once)
    lane = jax.lax.broadcasted_iota(jnp.int32, (1, BHW), 1)
    mask0 = (lane < HW).astype(f32)          # image 0 lanes
    mask1 = 1.0 - mask0                      # image 1 lanes
    idx2 = lane[:, 0:B]                      # (1, B) = [0, 1]

    def mm(a, b):
        return jnp.dot(a, b, preferred_element_type=f32)

    def relu(v):
        return jnp.maximum(v, 0.0)

    def cols2(a, b):                         # (R,1),(R,1) -> (R,B)
        return jnp.where(idx2 == 0, a, b)

    def expand(c):                           # (R,B) -> (R,BHW) per-image bcast
        return c[:, 0:1] * mask0 + c[:, 1:2] * mask1

    def per_image_mean(feat):                # (R,BHW) -> (R,B)
        s0 = jnp.sum(feat * mask0, axis=1, keepdims=True)
        sa = jnp.sum(feat, axis=1, keepdims=True)
        return cols2(s0, sa - s0) * (1.0 / HW)

    def se_gate(feat, k):
        # NOTE: the two tiny FC matmuls are batched over both images (N=2);
        # they are small enough that MXU latency is the only cost here.
        m = per_image_mean(feat)                           # (D, B)
        h = relu(mm(se1_ref[k], m))                        # (DR, B)
        g = jax.nn.sigmoid(mm(se2_ref[k], h))              # (D, B)
        return expand(g)                                   # (D, BHW)

    # --- stage 1: one block-diagonal matmul; biases folded via ones-row ------
    s1 = relu(mm(w1_ref[...], act_ref[...]))               # (40, BHW) f32
    ab1 = s1[0:8]
    ab6 = s1[8:16]
    ab12 = s1[16:24]
    ab18 = s1[24:32]
    res3 = s1[32:40]                                       # relu(conv3(x))

    # stage features into the scratch slab: rows = [d6, d12, ab18, ab1, d18]
    feat_ref[16:24, :] = ab18.astype(bf16)
    feat_ref[24:32, :] = ab1.astype(bf16)

    d6 = ab6 * se_gate(ab6, 0)
    feat_ref[0:8, :] = d6.astype(bf16)

    # conv12 over concat([d6, ab12]) == split weights + accumulate
    c12 = relu(mm(w2_ref[16:24, 0:D], d6.astype(bf16)) +
               mm(w2_ref[24:32, 0:D], ab12.astype(bf16)) + bias_ref[0])
    d12 = c12 * se_gate(c12, 1)
    feat_ref[8:16, :] = d12.astype(bf16)

    # conv18 over staged [d6, d12, ab18]: single K=24 matmul
    c18 = relu(mm(w2_ref[0:8, 0:24], feat_ref[0:24, :]) + bias_ref[1])
    d18 = c18 * se_gate(c18, 2)
    feat_ref[32:40, :] = d18.astype(bf16)

    # image-level pooling branch; bilinear upsample of a 1x1 map == broadcast,
    # so the pooled feature stays a per-image (D,1) column -> folded into the
    # conv_output effective bias.
    xm = per_image_mean(act_ref[0:CIN, :].astype(f32))     # (CIN, B)
    pf = relu(mm(w2_ref[32:40, 0:CIN], xm) + bias_ref[3])  # (D, B)
    effb = mm(w2_ref[40:48, 0:D], pf) + bias_ref[2]        # (D, B)

    # conv_output over staged [d6, d12, ab18(zero wt), ab1, d18]: one K=40
    # matmul + per-image effective bias, then the residual conv3 branch.
    out = relu(mm(w2_ref[8:16, 0:40], feat_ref[0:40, :]) + expand(effb))
    out_ref[...] = out + res3                              # (D, BHW), unmasked


# ------------------------------- wrapper --------------------------------------
def _im2col(x_nchw, dil):
    """Dilated-3x3 im2col: (B, CIN, H, W) -> (B, 9*CIN, H*W)."""
    b, c, h, w = x_nchw.shape
    xp = jnp.pad(x_nchw, ((0, 0), (0, 0), (dil, dil), (dil, dil)))
    patches = [xp[:, :, ky * dil:ky * dil + h, kx * dil:kx * dil + w]
               for ky in range(3) for kx in range(3)]
    return jnp.concatenate(patches, axis=1).reshape(b, 9 * c, h * w)


def _pack_activation(x_nchw):
    """(B,CIN,H,W) -> (K1P, B*HW) bf16: rows = [x | d2 | d3 | d4 | ones | 0]."""
    def fold(a):                              # (B, R, HW) -> (R, B*HW)
        return jnp.transpose(a, (1, 0, 2)).reshape(a.shape[1], BHW)

    rows = [fold(x_nchw.reshape(B, CIN, HW))]
    for dil in (2, 3, 4):
        rows.append(fold(_im2col(x_nchw, dil)))
    rows.append(jnp.ones((1, BHW), jnp.float32))
    act = jnp.concatenate(rows, axis=0)                    # (113, BHW)
    act = jnp.pad(act, ((0, K1P - act.shape[0]), (0, 0)))
    return act.astype(jnp.bfloat16)


def hfsm_forward(x_nchw, params):
    """x_nchw: (B, CIN, H, W) float32. Returns (B, D, H, W)."""
    act = _pack_activation(x_nchw)
    args = (act, params["w1"], params["w2"], params["w_se1"],
            params["w_se2"], params["bias"])

    def fullspec(a):
        nd = a.ndim
        return pl.BlockSpec(tuple(a.shape), lambda i, _nd=nd: (0,) * _nd)

    out = pl.pallas_call(
        hfsm_kernel,
        out_shape=jax.ShapeDtypeStruct((D, BHW), jnp.float32),
        grid=(1,),
        in_specs=[fullspec(a) for a in args],
        out_specs=pl.BlockSpec((D, BHW), lambda i: (0, 0)),
        scratch_shapes=[pltpu.VMEM((40, BHW), jnp.bfloat16)],
        compiler_params=pltpu.CompilerParams(
            dimension_semantics=("arbitrary",)),
    )(*args)

    # (D, B*HW) -> (B, D, H, W) (tiny wrapper-side transpose)
    return jnp.transpose(out.reshape(D, B, H, W), (1, 0, 2, 3))


# --------------------------- parameter construction ---------------------------
def make_params(key):
    ks = iter(jax.random.split(key, 64))

    def rnd(shape, scale=0.1):
        return scale * jax.random.normal(next(ks), shape, dtype=jnp.float32)

    def conv_block(cin, cout, k=1):
        # weight in (out, in) / (out, ky, kx, in) layout; BN (eval mode,
        # running_mean=0, running_var=1) folded into weight/bias.
        w = rnd((cout, cin)) if k == 1 else rnd((cout, k, k, cin))
        conv_b = rnd((cout,))
        gamma = 1.0 + rnd((cout,))
        beta = rnd((cout,))
        scale = gamma / jnp.sqrt(1.0 + 1e-5)
        w = w * scale.reshape((cout,) + (1,) * (w.ndim - 1))
        return w, beta + conv_b * scale

    raw = {}
    raw["w_ab1"], raw["b_ab1"] = conv_block(CIN, D)          # atrous_block1
    raw["wk6"], raw["b_ab6"] = conv_block(CIN, D, 3)         # atrous_block6
    raw["wk12"], raw["b_ab12"] = conv_block(CIN, D, 3)       # atrous_block12
    raw["wk18"], raw["b_ab18"] = conv_block(CIN, D, 3)       # atrous_block18
    raw["w_c12"], raw["b_c12"] = conv_block(2 * D, D)        # conv12
    raw["w_c18"], raw["b_c18"] = conv_block(3 * D, D)        # conv18
    raw["w_cout"], raw["b_cout"] = conv_block(5 * D, D)      # conv_output
    raw["w_pool"], raw["b_pool"] = conv_block(CIN, D)        # pool-branch conv
    raw["w_c3"], raw["b_c3"] = conv_block(CIN, D)            # conv3 residual
    raw["se_w1"] = jnp.stack([rnd((DR, D)) for _ in range(3)])   # (3, DR, D)
    raw["se_w2"] = jnp.stack([rnd((D, DR)) for _ in range(3)])   # (3, D, DR)

    # ---- stage-1 block-diagonal weight (40, K1P) with folded biases ----------
    w1 = jnp.zeros((40, K1P), jnp.float32)
    w1 = w1.at[0:8, 0:CIN].set(raw["w_ab1"])
    w1 = w1.at[8:16, CIN:CIN + K9].set(raw["wk6"].reshape(D, K9))
    w1 = w1.at[16:24, CIN + K9:CIN + 2 * K9].set(raw["wk12"].reshape(D, K9))
    w1 = w1.at[24:32, CIN + 2 * K9:CIN + 3 * K9].set(raw["wk18"].reshape(D, K9))
    w1 = w1.at[32:40, 0:CIN].set(raw["w_c3"])
    w1 = w1.at[:, ONES_ROW].set(jnp.concatenate(
        [raw["b_ab1"], raw["b_ab6"], raw["b_ab12"], raw["b_ab18"], raw["b_c3"]]))

    # ---- stage-2 packed weights (48, 40) --------------------------------------
    wc12, wc18, wco = raw["w_c12"], raw["w_c18"], raw["w_cout"]
    w2 = jnp.zeros((48, 40), jnp.float32)
    # rows 0:8  : conv18 over staged [d6, d12, ab18]
    w2 = w2.at[0:8, 0:24].set(wc18)
    # rows 8:16 : conv_output over staged [d6, d12, ab18(zero), ab1, d18]
    w_out = jnp.concatenate([wco[:, D:2 * D], wco[:, 2 * D:3 * D],
                             jnp.zeros((D, D), jnp.float32),
                             wco[:, 0:D], wco[:, 3 * D:4 * D]], axis=1)
    w2 = w2.at[8:16, 0:40].set(w_out)
    # rows 16:24 / 24:32: conv12 split into d6-part / ab12-part
    w2 = w2.at[16:24, 0:D].set(wc12[:, 0:D])
    w2 = w2.at[24:32, 0:D].set(wc12[:, D:2 * D])
    # rows 32:40: pool-branch conv (CIN -> D)
    w2 = w2.at[32:40, 0:CIN].set(raw["w_pool"])
    # rows 40:48: conv_output pool part (folded into effective bias)
    w2 = w2.at[40:48, 0:D].set(wco[:, 4 * D:5 * D])

    bias = jnp.stack([raw["b_c12"], raw["b_c18"],
                      raw["b_cout"], raw["b_pool"]])[:, :, None]   # (4, D, 1)

    p = {
        "w1": w1.astype(jnp.bfloat16),
        "w2": w2.astype(jnp.bfloat16),
        "w_se1": raw["se_w1"],
        "w_se2": raw["se_w2"],
        "bias": bias,
    }
    return p, raw


# --------------------------- pure-JAX reference --------------------------------
def hfsm_reference(x, raw):
    """NCHW reference mirroring the PyTorch module (BN folded)."""
    hi = jax.lax.Precision.HIGHEST

    def conv1x1(a, w, b):
        y = jnp.einsum('oc,bchw->bohw', w, a, precision=hi)
        return jax.nn.relu(y + b[None, :, None, None])

    def conv3x3(a, w, b, dil):
        y = jax.lax.conv_general_dilated(
            a, jnp.transpose(w, (0, 3, 1, 2)), window_strides=(1, 1),
            padding=[(dil, dil), (dil, dil)], rhs_dilation=(dil, dil),
            dimension_numbers=('NCHW', 'OIHW', 'NCHW'), precision=hi)
        return jax.nn.relu(y + b[None, :, None, None])

    def se(f, i):
        y = jnp.mean(f, axis=(2, 3))
        y = jax.nn.relu(jnp.einsum('bd,rd->br', y, raw["se_w1"][i], precision=hi))
        y = jax.nn.sigmoid(jnp.einsum('br,dr->bd', y, raw["se_w2"][i], precision=hi))
        return f * y[:, :, None, None]

    ab1 = conv1x1(x, raw["w_ab1"], raw["b_ab1"])
    ab6 = conv3x3(x, raw["wk6"], raw["b_ab6"], 2)
    d6 = se(ab6, 0)
    ab12 = conv3x3(x, raw["wk12"], raw["b_ab12"], 3)
    ab12 = conv1x1(jnp.concatenate([d6, ab12], 1), raw["w_c12"], raw["b_c12"])
    d12 = se(ab12, 1)
    ab18 = conv3x3(x, raw["wk18"], raw["b_ab18"], 4)
    ab18 = conv1x1(jnp.concatenate([d6, d12, ab18], 1), raw["w_c18"], raw["b_c18"])
    d18 = se(ab18, 2)
    pool = jnp.mean(x, axis=(2, 3), keepdims=True)
    pool = conv1x1(pool, raw["w_pool"], raw["b_pool"])
    pool = jnp.broadcast_to(pool, (B, D, H, W))
    out = conv1x1(jnp.concatenate([ab1, d6, d12, d18, pool], 1),
                  raw["w_cout"], raw["b_cout"])
    return out + conv1x1(x, raw["w_c3"], raw["b_c3"])


# ---------------------------------- main --------------------------------------
if __name__ == "__main__":
    key = jax.random.PRNGKey(0)
    kx, kp = jax.random.split(key)
    x = jax.random.normal(kx, (B, CIN, H, W), dtype=jnp.float32)
    params, raw = make_params(kp)

    out = jax.jit(hfsm_forward)(x, params)
    out = jax.block_until_ready(out)

    assert out.shape == (B, D, H, W), out.shape
    assert bool(jnp.all(jnp.isfinite(out)))

    ref = hfsm_reference(x, raw)
    err = float(jnp.max(jnp.abs(out - ref)))
    assert err < 5e-2, f"mismatch vs reference: {err}"   # bf16 MXU operands

    print("KERNEL_OK")
</pallas_src>

<mosaic_0001>
module attributes {stable_mosaic.version = 11 : i64} {
  func.func @hfsm_kernel(%arg0: i32, %arg1: memref<120x512xbf16, #tpu.memory_space<vmem>>, %arg2: memref<40x120xbf16, #tpu.memory_space<vmem>>, %arg3: memref<48x40xbf16, #tpu.memory_space<vmem>>, %arg4: memref<3x2x8xf32, #tpu.memory_space<vmem>>, %arg5: memref<3x8x2xf32, #tpu.memory_space<vmem>>, %arg6: memref<4x8x1xf32, #tpu.memory_space<vmem>>, %arg7: memref<8x512xf32, #tpu.memory_space<vmem>>, %arg8: memref<40x512xbf16, #tpu.memory_space<vmem>>) attributes {dimension_semantics = [#tpu.dimension_semantics<arbitrary>], iteration_bounds = array<i64: 1>, scalar_prefetch = 0 : i64, scratch_operands = 1 : i64, tpu.core_type = #tpu.core_type<tc>, window_params = [{pipeline_mode = #tpu.pipeline_mode<synchronous>, transform_indices = @transform_0, window_bounds = array<i64: 120, 512>}, {pipeline_mode = #tpu.pipeline_mode<synchronous>, transform_indices = @transform_1, window_bounds = array<i64: 40, 120>}, {pipeline_mode = #tpu.pipeline_mode<synchronous>, transform_indices = @transform_2, window_bounds = array<i64: 48, 40>}, {pipeline_mode = #tpu.pipeline_mode<synchronous>, transform_indices = @transform_3, window_bounds = array<i64: 3, 2, 8>}, {pipeline_mode = #tpu.pipeline_mode<synchronous>, transform_indices = @transform_4, window_bounds = array<i64: 3, 8, 2>}, {pipeline_mode = #tpu.pipeline_mode<synchronous>, transform_indices = @transform_5, window_bounds = array<i64: 4, 8, 1>}, {pipeline_mode = #tpu.pipeline_mode<synchronous>, transform_indices = @transform_6, window_bounds = array<i64: 8, 512>}]} {
    %0 = tpu.iota {dimensions = array<i32: 1>} : vector<1x512xi32>
    %c256_i32 = arith.constant 256 : i32
    %1 = vector.broadcast %c256_i32 : i32 to vector<1x512xi32>
    %2 = arith.cmpi slt, %0, %1 : vector<1x512xi32>
    %3 = arith.extui %2 : vector<1x512xi1> to vector<1x512xi32>
    %4 = arith.sitofp %3 : vector<1x512xi32> to vector<1x512xf32>
    %cst = arith.constant 1.000000e+00 : f32
    %5 = vector.broadcast %cst : f32 to vector<1x512xf32>
    %6 = arith.subf %5, %4 : vector<1x512xf32>
    %7 = vector.extract_strided_slice %0 {offsets = [0, 0], sizes = [1, 2], strides = [1, 1]} : vector<1x512xi32> to vector<1x2xi32>
    %c0 = arith.constant 0 : index
    %c0_0 = arith.constant 0 : index
    %8 = vector.load %arg2[%c0, %c0_0] : memref<40x120xbf16, #tpu.memory_space<vmem>>, vector<40x120xbf16>
    %c0_1 = arith.constant 0 : index
    %c0_2 = arith.constant 0 : index
    %9 = vector.load %arg1[%c0_1, %c0_2] : memref<120x512xbf16, #tpu.memory_space<vmem>>, vector<120x512xbf16>
    %cst_3 = arith.constant dense<0.000000e+00> : vector<40x512xf32>
    %10 = tpu.matmul %8, %9, %cst_3 {dimension_numbers = #tpu.dot_dimension_numbers<[1], [0], [0], [1], [0, 0, 1, 1], [], []>} : vector<40x120xbf16>, vector<120x512xbf16>, vector<40x512xf32> -> vector<40x512xf32>
    %cst_4 = arith.constant 0.000000e+00 : f32
    %11 = vector.broadcast %cst_4 : f32 to vector<40x512xf32>
    %12 = arith.maximumf %10, %11 : vector<40x512xf32>
    %13 = vector.extract_strided_slice %12 {offsets = [0, 0], sizes = [8, 512], strides = [1, 1]} : vector<40x512xf32> to vector<8x512xf32>
    %14 = vector.extract_strided_slice %12 {offsets = [8, 0], sizes = [8, 512], strides = [1, 1]} : vector<40x512xf32> to vector<8x512xf32>
    %15 = vector.extract_strided_slice %12 {offsets = [16, 0], sizes = [8, 512], strides = [1, 1]} : vector<40x512xf32> to vector<8x512xf32>
    %16 = vector.extract_strided_slice %12 {offsets = [24, 0], sizes = [8, 512], strides = [1, 1]} : vector<40x512xf32> to vector<8x512xf32>
    %17 = vector.extract_strided_slice %12 {offsets = [32, 0], sizes = [8, 512], strides = [1, 1]} : vector<40x512xf32> to vector<8x512xf32>
    %18 = arith.truncf %16 : vector<8x512xf32> to vector<8x512xbf16>
    %c16 = arith.constant 16 : index
    %c0_5 = arith.constant 0 : index
    %19 = vector.load %arg8[%c16, %c0_5] : memref<40x512xbf16, #tpu.memory_space<vmem>>, vector<8x512xbf16>
    tpu.vector_store %arg8[%c16, %c0_5], %18 {strides = array<i32>} : memref<40x512xbf16, #tpu.memory_space<vmem>>, vector<8x512xbf16>,
    %20 = arith.truncf %13 : vector<8x512xf32> to vector<8x512xbf16>
    %c24 = arith.constant 24 : index
    %c0_6 = arith.constant 0 : index
    %21 = vector.load %arg8[%c24, %c0_6] : memref<40x512xbf16, #tpu.memory_space<vmem>>, vector<8x512xbf16>
    tpu.vector_store %arg8[%c24, %c0_6], %20 {strides = array<i32>} : memref<40x512xbf16, #tpu.memory_space<vmem>>, vector<8x512xbf16>,
    %22 = vector.broadcast %4 : vector<1x512xf32> to vector<8x512xf32>
    %23 = arith.mulf %14, %22 : vector<8x512xf32>
    %cst_7 = arith.constant dense<0.000000e+00> : vector<8xf32>
    %24 = vector.multi_reduction <add>, %23, %cst_7 [1] : vector<8x512xf32> to vector<8xf32>
    %25 = vector.shape_cast %24 : vector<8xf32> to vector<8x1xf32>
    %cst_8 = arith.constant dense<0.000000e+00> : vector<8xf32>
    %26 = vector.multi_reduction <add>, %14, %cst_8 [1] : vector<8x512xf32> to vector<8xf32>
    %27 = vector.shape_cast %26 : vector<8xf32> to vector<8x1xf32>
    %28 = arith.subf %27, %25 : vector<8x1xf32>
    %c0_i32 = arith.constant 0 : i32
    %29 = vector.broadcast %c0_i32 : i32 to vector<1x2xi32>
    %30 = arith.cmpi eq, %7, %29 : vector<1x2xi32>
    %31 = vector.shape_cast %30 : vector<1x2xi1> to vector<1x2xi1>
    %32 = vector.broadcast %31 : vector<1x2xi1> to vector<8x2xi1>
    %33 = vector.shape_cast %25 : vector<8x1xf32> to vector<8x1xf32>
    %34 = vector.broadcast %33 : vector<8x1xf32> to vector<8x2xf32>
    %35 = vector.shape_cast %28 : vector<8x1xf32> to vector<8x1xf32>
    %36 = vector.broadcast %35 : vector<8x1xf32> to vector<8x2xf32>
    %37 = arith.select %32, %34, %36 : vector<8x2xi1>, vector<8x2xf32>
    %cst_9 = arith.constant 3.906250e-03 : f32
    %38 = vector.broadcast %cst_9 : f32 to vector<8x2xf32>
    %39 = arith.mulf %37, %38 : vector<8x2xf32>
    %c0_10 = arith.constant 0 : index
    %c0_11 = arith.constant 0 : index
    %c0_12 = arith.constant 0 : index
    %40 = vector.load %arg4[%c0_10, %c0_11, %c0_12] : memref<3x2x8xf32, #tpu.memory_space<vmem>>, vector<1x2x8xf32>
    %41 = vector.shape_cast %40 : vector<1x2x8xf32> to vector<2x8xf32>
    %cst_13 = arith.constant dense<0.000000e+00> : vector<2x2xf32>
    %42 = tpu.matmul %41, %39, %cst_13 {dimension_numbers = #tpu.dot_dimension_numbers<[1], [0], [0], [1], [0, 0, 1, 1], [], []>} : vector<2x8xf32>, vector<8x2xf32>, vector<2x2xf32> -> vector<2x2xf32>
    %cst_14 = arith.constant 0.000000e+00 : f32
    %43 = vector.broadcast %cst_14 : f32 to vector<2x2xf32>
    %44 = arith.maximumf %42, %43 : vector<2x2xf32>
    %c0_15 = arith.constant 0 : index
    %c0_16 = arith.constant 0 : index
    %c0_17 = arith.constant 0 : index
    %45 = vector.load %arg5[%c0_15, %c0_16, %c0_17] : memref<3x8x2xf32, #tpu.memory_space<vmem>>, vector<1x8x2xf32>
    %46 = vector.shape_cast %45 : vector<1x8x2xf32> to vector<8x2xf32>
    %cst_18 = arith.constant dense<0.000000e+00> : vector<8x2xf32>
    %47 = tpu.matmul %46, %44, %cst_18 {dimension_numbers = #tpu.dot_dimension_numbers<[1], [0], [0], [1], [0, 0, 1, 1], [], []>} : vector<8x2xf32>, vector<2x2xf32>, vector<8x2xf32> -> vector<8x2xf32>
    %48 = arith.negf %47 : vector<8x2xf32>
    %49 = math.exp %48 : vector<8x2xf32>
    %cst_19 = arith.constant 1.000000e+00 : f32
    %50 = vector.broadcast %cst_19 : f32 to vector<8x2xf32>
    %51 = arith.addf %50, %49 : vector<8x2xf32>
    %52 = arith.divf %50, %51 : vector<8x2xf32>
    %53 = vector.extract_strided_slice %52 {offsets = [0, 0], sizes = [8, 1], strides = [1, 1]} : vector<8x2xf32> to vector<8x1xf32>
    %54 = vector.broadcast %53 : vector<8x1xf32> to vector<8x512xf32>
    %55 = vector.broadcast %4 : vector<1x512xf32> to vector<8x512xf32>
    %56 = arith.mulf %54, %55 : vector<8x512xf32>
    %57 = vector.extract_strided_slice %52 {offsets = [0, 1], sizes = [8, 1], strides = [1, 1]} : vector<8x2xf32> to vector<8x1xf32>
    %58 = vector.broadcast %57 : vector<8x1xf32> to vector<8x512xf32>
    %59 = vector.broadcast %6 : vector<1x512xf32> to vector<8x512xf32>
    %60 = arith.mulf %58, %59 : vector<8x512xf32>
    %61 = arith.addf %56, %60 : vector<8x512xf32>
    %62 = arith.mulf %14, %61 : vector<8x512xf32>
    %63 = arith.truncf %62 : vector<8x512xf32> to vector<8x512xbf16>
    %c0_20 = arith.constant 0 : index
    %c0_21 = arith.constant 0 : index
    %64 = vector.load %arg8[%c0_20, %c0_21] : memref<40x512xbf16, #tpu.memory_space<vmem>>, vector<8x512xbf16>
    tpu.vector_store %arg8[%c0_20, %c0_21], %63 {strides = array<i32>} : memref<40x512xbf16, #tpu.memory_space<vmem>>, vector<8x512xbf16>,
    %c16_22 = arith.constant 16 : index
    %c0_23 = arith.constant 0 : index
    %65 = vector.load %arg3[%c16_22, %c0_23] : memref<48x40xbf16, #tpu.memory_space<vmem>>, vector<8x8xbf16>
    %66 = arith.truncf %62 : vector<8x512xf32> to vector<8x512xbf16>
    %cst_24 = arith.constant dense<0.000000e+00> : vector<8x512xf32>
    %67 = tpu.matmul %65, %66, %cst_24 {dimension_numbers = #tpu.dot_dimension_numbers<[1], [0], [0], [1], [0, 0, 1, 1], [], []>} : vector<8x8xbf16>, vector<8x512xbf16>, vector<8x512xf32> -> vector<8x512xf32>
    %c24_25 = arith.constant 24 : index
    %c0_26 = arith.constant 0 : index
    %68 = vector.load %arg3[%c24_25, %c0_26] : memref<48x40xbf16, #tpu.memory_space<vmem>>, vector<8x8xbf16>
    %69 = arith.truncf %15 : vector<8x512xf32> to vector<8x512xbf16>
    %cst_27 = arith.constant dense<0.000000e+00> : vector<8x512xf32>
    %70 = tpu.matmul %68, %69, %cst_27 {dimension_numbers = #tpu.dot_dimension_numbers<[1], [0], [0], [1], [0, 0, 1, 1], [], []>} : vector<8x8xbf16>, vector<8x512xbf16>, vector<8x512xf32> -> vector<8x512xf32>
    %71 = arith.addf %67, %70 : vector<8x512xf32>
    %c0_28 = arith.constant 0 : index
    %c0_29 = arith.constant 0 : index
    %c0_30 = arith.constant 0 : index
    %72 = vector.load %arg6[%c0_28, %c0_29, %c0_30] : memref<4x8x1xf32, #tpu.memory_space<vmem>>, vector<1x8x1xf32>
    %73 = vector.shape_cast %72 : vector<1x8x1xf32> to vector<8x1xf32>
    %74 = vector.broadcast %73 : vector<8x1xf32> to vector<8x512xf32>
    %75 = arith.addf %71, %74 : vector<8x512xf32>
    %cst_31 = arith.constant 0.000000e+00 : f32
    %76 = vector.broadcast %cst_31 : f32 to vector<8x512xf32>
    %77 = arith.maximumf %75, %76 : vector<8x512xf32>
    %78 = vector.broadcast %4 : vector<1x512xf32> to vector<8x512xf32>
    %79 = arith.mulf %77, %78 : vector<8x512xf32>
    %cst_32 = arith.constant dense<0.000000e+00> : vector<8xf32>
    %80 = vector.multi_reduction <add>, %79, %cst_32 [1] : vector<8x512xf32> to vector<8xf32>
    %81 = vector.shape_cast %80 : vector<8xf32> to vector<8x1xf32>
    %cst_33 = arith.constant dense<0.000000e+00> : vector<8xf32>
    %82 = vector.multi_reduction <add>, %77, %cst_33 [1] : vector<8x512xf32> to vector<8xf32>
    %83 = vector.shape_cast %82 : vector<8xf32> to vector<8x1xf32>
    %84 = arith.subf %83, %81 : vector<8x1xf32>
    %c0_i32_34 = arith.constant 0 : i32
    %85 = vector.broadcast %c0_i32_34 : i32 to vector<1x2xi32>
    %86 = arith.cmpi eq, %7, %85 : vector<1x2xi32>
    %87 = vector.shape_cast %86 : vector<1x2xi1> to vector<1x2xi1>
    %88 = vector.broadcast %87 : vector<1x2xi1> to vector<8x2xi1>
    %89 = vector.shape_cast %81 : vector<8x1xf32> to vector<8x1xf32>
    %90 = vector.broadcast %89 : vector<8x1xf32> to vector<8x2xf32>
    %91 = vector.shape_cast %84 : vector<8x1xf32> to vector<8x1xf32>
    %92 = vector.broadcast %91 : vector<8x1xf32> to vector<8x2xf32>
    %93 = arith.select %88, %90, %92 : vector<8x2xi1>, vector<8x2xf32>
    %cst_35 = arith.constant 3.906250e-03 : f32
    %94 = vector.broadcast %cst_35 : f32 to vector<8x2xf32>
    %95 = arith.mulf %93, %94 : vector<8x2xf32>
    %c1 = arith.constant 1 : index
    %c0_36 = arith.constant 0 : index
    %c0_37 = arith.constant 0 : index
    %96 = vector.load %arg4[%c1, %c0_36, %c0_37] : memref<3x2x8xf32, #tpu.memory_space<vmem>>, vector<1x2x8xf32>
    %97 = vector.shape_cast %96 : vector<1x2x8xf32> to vector<2x8xf32>
    %cst_38 = arith.constant dense<0.000000e+00> : vector<2x2xf32>
    %98 = tpu.matmul %97, %95, %cst_38 {dimension_numbers = #tpu.dot_dimension_numbers<[1], [0], [0], [1], [0, 0, 1, 1], [], []>} : vector<2x8xf32>, vector<8x2xf32>, vector<2x2xf32> -> vector<2x2xf32>
    %cst_39 = arith.constant 0.000000e+00 : f32
    %99 = vector.broadcast %cst_39 : f32 to vector<2x2xf32>
    %100 = arith.maximumf %98, %99 : vector<2x2xf32>
    %c1_40 = arith.constant 1 : index
    %c0_41 = arith.constant 0 : index
    %c0_42 = arith.constant 0 : index
    %101 = vector.load %arg5[%c1_40, %c0_41, %c0_42] : memref<3x8x2xf32, #tpu.memory_space<vmem>>, vector<1x8x2xf32>
    %102 = vector.shape_cast %101 : vector<1x8x2xf32> to vector<8x2xf32>
    %cst_43 = arith.constant dense<0.000000e+00> : vector<8x2xf32>
    %103 = tpu.matmul %102, %100, %cst_43 {dimension_numbers = #tpu.dot_dimension_numbers<[1], [0], [0], [1], [0, 0, 1, 1], [], []>} : vector<8x2xf32>, vector<2x2xf32>, vector<8x2xf32> -> vector<8x2xf32>
    %104 = arith.negf %103 : vector<8x2xf32>
    %105 = math.exp %104 : vector<8x2xf32>
    %cst_44 = arith.constant 1.000000e+00 : f32
    %106 = vector.broadcast %cst_44 : f32 to vector<8x2xf32>
    %107 = arith.addf %106, %105 : vector<8x2xf32>
    %108 = arith.divf %106, %107 : vector<8x2xf32>
    %109 = vector.extract_strided_slice %108 {offsets = [0, 0], sizes = [8, 1], strides = [1, 1]} : vector<8x2xf32> to vector<8x1xf32>
    %110 = vector.broadcast %109 : vector<8x1xf32> to vector<8x512xf32>
    %111 = vector.broadcast %4 : vector<1x512xf32> to vector<8x512xf32>
    %112 = arith.mulf %110, %111 : vector<8x512xf32>
    %113 = vector.extract_strided_slice %108 {offsets = [0, 1], sizes = [8, 1], strides = [1, 1]} : vector<8x2xf32> to vector<8x1xf32>
    %114 = vector.broadcast %113 : vector<8x1xf32> to vector<8x512xf32>
    %115 = vector.broadcast %6 : vector<1x512xf32> to vector<8x512xf32>
    %116 = arith.mulf %114, %115 : vector<8x512xf32>
    %117 = arith.addf %112, %116 : vector<8x512xf32>
    %118 = arith.mulf %77, %117 : vector<8x512xf32>
    %119 = arith.truncf %118 : vector<8x512xf32> to vector<8x512xbf16>
    %c8 = arith.constant 8 : index
    %c0_45 = arith.constant 0 : index
    %120 = vector.load %arg8[%c8, %c0_45] : memref<40x512xbf16, #tpu.memory_space<vmem>>, vector<8x512xbf16>
    tpu.vector_store %arg8[%c8, %c0_45], %119 {strides = array<i32>} : memref<40x512xbf16, #tpu.memory_space<vmem>>, vector<8x512xbf16>,
    %c0_46 = arith.constant 0 : index
    %c0_47 = arith.constant 0 : index
    %121 = vector.load %arg3[%c0_46, %c0_47] : memref<48x40xbf16, #tpu.memory_space<vmem>>, vector<8x24xbf16>
    %c0_48 = arith.constant 0 : index
    %c0_49 = arith.constant 0 : index
    %122 = vector.load %arg8[%c0_48, %c0_49] : memref<40x512xbf16, #tpu.memory_space<vmem>>, vector<24x512xbf16>
    %cst_50 = arith.constant dense<0.000000e+00> : vector<8x512xf32>
    %123 = tpu.matmul %121, %122, %cst_50 {dimension_numbers = #tpu.dot_dimension_numbers<[1], [0], [0], [1], [0, 0, 1, 1], [], []>} : vector<8x24xbf16>, vector<24x512xbf16>, vector<8x512xf32> -> vector<8x512xf32>
    %c1_51 = arith.constant 1 : index
    %c0_52 = arith.constant 0 : index
    %c0_53 = arith.constant 0 : index
    %124 = vector.load %arg6[%c1_51, %c0_52, %c0_53] : memref<4x8x1xf32, #tpu.memory_space<vmem>>, vector<1x8x1xf32>
    %125 = vector.shape_cast %124 : vector<1x8x1xf32> to vector<8x1xf32>
    %126 = vector.broadcast %125 : vector<8x1xf32> to vector<8x512xf32>
    %127 = arith.addf %123, %126 : vector<8x512xf32>
    %cst_54 = arith.constant 0.000000e+00 : f32
    %128 = vector.broadcast %cst_54 : f32 to vector<8x512xf32>
    %129 = arith.maximumf %127, %128 : vector<8x512xf32>
    %130 = vector.broadcast %4 : vector<1x512xf32> to vector<8x512xf32>
    %131 = arith.mulf %129, %130 : vector<8x512xf32>
    %cst_55 = arith.constant dense<0.000000e+00> : vector<8xf32>
    %132 = vector.multi_reduction <add>, %131, %cst_55 [1] : vector<8x512xf32> to vector<8xf32>
    %133 = vector.shape_cast %132 : vector<8xf32> to vector<8x1xf32>
    %cst_56 = arith.constant dense<0.000000e+00> : vector<8xf32>
    %134 = vector.multi_reduction <add>, %129, %cst_56 [1] : vector<8x512xf32> to vector<8xf32>
    %135 = vector.shape_cast %134 : vector<8xf32> to vector<8x1xf32>
    %136 = arith.subf %135, %133 : vector<8x1xf32>
    %c0_i32_57 = arith.constant 0 : i32
    %137 = vector.broadcast %c0_i32_57 : i32 to vector<1x2xi32>
    %138 = arith.cmpi eq, %7, %137 : vector<1x2xi32>
    %139 = vector.shape_cast %138 : vector<1x2xi1> to vector<1x2xi1>
    %140 = vector.broadcast %139 : vector<1x2xi1> to vector<8x2xi1>
    %141 = vector.shape_cast %133 : vector<8x1xf32> to vector<8x1xf32>
    %142 = vector.broadcast %141 : vector<8x1xf32> to vector<8x2xf32>
    %143 = vector.shape_cast %136 : vector<8x1xf32> to vector<8x1xf32>
    %144 = vector.broadcast %143 : vector<8x1xf32> to vector<8x2xf32>
    %145 = arith.select %140, %142, %144 : vector<8x2xi1>, vector<8x2xf32>
    %cst_58 = arith.constant 3.906250e-03 : f32
    %146 = vector.broadcast %cst_58 : f32 to vector<8x2xf32>
    %147 = arith.mulf %145, %146 : vector<8x2xf32>
    %c2 = arith.constant 2 : index
    %c0_59 = arith.constant 0 : index
    %c0_60 = arith.constant 0 : index
    %148 = vector.load %arg4[%c2, %c0_59, %c0_60] : memref<3x2x8xf32, #tpu.memory_space<vmem>>, vector<1x2x8xf32>
    %149 = vector.shape_cast %148 : vector<1x2x8xf32> to vector<2x8xf32>
    %cst_61 = arith.constant dense<0.000000e+00> : vector<2x2xf32>
    %150 = tpu.matmul %149, %147, %cst_61 {dimension_numbers = #tpu.dot_dimension_numbers<[1], [0], [0], [1], [0, 0, 1, 1], [], []>} : vector<2x8xf32>, vector<8x2xf32>, vector<2x2xf32> -> vector<2x2xf32>
    %cst_62 = arith.constant 0.000000e+00 : f32
    %151 = vector.broadcast %cst_62 : f32 to vector<2x2xf32>
    %152 = arith.maximumf %150, %151 : vector<2x2xf32>
    %c2_63 = arith.constant 2 : index
    %c0_64 = arith.constant 0 : index
    %c0_65 = arith.constant 0 : index
    %153 = vector.load %arg5[%c2_63, %c0_64, %c0_65] : memref<3x8x2xf32, #tpu.memory_space<vmem>>, vector<1x8x2xf32>
    %154 = vector.shape_cast %153 : vector<1x8x2xf32> to vector<8x2xf32>
    %cst_66 = arith.constant dense<0.000000e+00> : vector<8x2xf32>
    %155 = tpu.matmul %154, %152, %cst_66 {dimension_numbers = #tpu.dot_dimension_numbers<[1], [0], [0], [1], [0, 0, 1, 1], [], []>} : vector<8x2xf32>, vector<2x2xf32>, vector<8x2xf32> -> vector<8x2xf32>
    %156 = arith.negf %155 : vector<8x2xf32>
    %157 = math.exp %156 : vector<8x2xf32>
    %cst_67 = arith.constant 1.000000e+00 : f32
    %158 = vector.broadcast %cst_67 : f32 to vector<8x2xf32>
    %159 = arith.addf %158, %157 : vector<8x2xf32>
    %160 = arith.divf %158, %159 : vector<8x2xf32>
    %161 = vector.extract_strided_slice %160 {offsets = [0, 0], sizes = [8, 1], strides = [1, 1]} : vector<8x2xf32> to vector<8x1xf32>
    %162 = vector.broadcast %161 : vector<8x1xf32> to vector<8x512xf32>
    %163 = vector.broadcast %4 : vector<1x512xf32> to vector<8x512xf32>
    %164 = arith.mulf %162, %163 : vector<8x512xf32>
    %165 = vector.extract_strided_slice %160 {offsets = [0, 1], sizes = [8, 1], strides = [1, 1]} : vector<8x2xf32> to vector<8x1xf32>
    %166 = vector.broadcast %165 : vector<8x1xf32> to vector<8x512xf32>
    %167 = vector.broadcast %6 : vector<1x512xf32> to vector<8x512xf32>
    %168 = arith.mulf %166, %167 : vector<8x512xf32>
    %169 = arith.addf %164, %168 : vector<8x512xf32>
    %170 = arith.mulf %129, %169 : vector<8x512xf32>
    %171 = arith.truncf %170 : vector<8x512xf32> to vector<8x512xbf16>
    %c32 = arith.constant 32 : index
    %c0_68 = arith.constant 0 : index
    %172 = vector.load %arg8[%c32, %c0_68] : memref<40x512xbf16, #tpu.memory_space<vmem>>, vector<8x512xbf16>
    tpu.vector_store %arg8[%c32, %c0_68], %171 {strides = array<i32>} : memref<40x512xbf16, #tpu.memory_space<vmem>>, vector<8x512xbf16>,
    %c0_69 = arith.constant 0 : index
    %c0_70 = arith.constant 0 : index
    %173 = vector.load %arg1[%c0_69, %c0_70] : memref<120x512xbf16, #tpu.memory_space<vmem>>, vector<4x512xbf16>
    %174 = arith.extf %173 : vector<4x512xbf16> to vector<4x512xf32>
    %175 = vector.broadcast %4 : vector<1x512xf32> to vector<4x512xf32>
    %176 = arith.mulf %174, %175 : vector<4x512xf32>
    %cst_71 = arith.constant dense<0.000000e+00> : vector<4xf32>
    %177 = vector.multi_reduction <add>, %176, %cst_71 [1] : vector<4x512xf32> to vector<4xf32>
    %178 = vector.shape_cast %177 : vector<4xf32> to vector<4x1xf32>
    %cst_72 = arith.constant dense<0.000000e+00> : vector<4xf32>
    %179 = vector.multi_reduction <add>, %174, %cst_72 [1] : vector<4x512xf32> to vector<4xf32>
    %180 = vector.shape_cast %179 : vector<4xf32> to vector<4x1xf32>
    %181 = arith.subf %180, %178 : vector<4x1xf32>
    %c0_i32_73 = arith.constant 0 : i32
    %182 = vector.broadcast %c0_i32_73 : i32 to vector<1x2xi32>
    %183 = arith.cmpi eq, %7, %182 : vector<1x2xi32>
    %184 = vector.shape_cast %183 : vector<1x2xi1> to vector<1x2xi1>
    %185 = vector.broadcast %184 : vector<1x2xi1> to vector<4x2xi1>
    %186 = vector.shape_cast %178 : vector<4x1xf32> to vector<4x1xf32>
    %187 = vector.broadcast %186 : vector<4x1xf32> to vector<4x2xf32>
    %188 = vector.shape_cast %181 : vector<4x1xf32> to vector<4x1xf32>
    %189 = vector.broadcast %188 : vector<4x1xf32> to vector<4x2xf32>
    %190 = arith.select %185, %187, %189 : vector<4x2xi1>, vector<4x2xf32>
    %cst_74 = arith.constant 3.906250e-03 : f32
    %191 = vector.broadcast %cst_74 : f32 to vector<4x2xf32>
    %192 = arith.mulf %190, %191 : vector<4x2xf32>
    %c32_75 = arith.constant 32 : index
    %c0_76 = arith.constant 0 : index
    %193 = vector.load %arg3[%c32_75, %c0_76] : memref<48x40xbf16, #tpu.memory_space<vmem>>, vector<8x4xbf16>
    %cst_77 = arith.constant dense<0.000000e+00> : vector<8x2xf32>
    %194 = tpu.matmul %193, %192, %cst_77 {dimension_numbers = #tpu.dot_dimension_numbers<[1], [0], [0], [1], [0, 0, 1, 1], [], []>} : vector<8x4xbf16>, vector<4x2xf32>, vector<8x2xf32> -> vector<8x2xf32>
    %c3 = arith.constant 3 : index
    %c0_78 = arith.constant 0 : index
    %c0_79 = arith.constant 0 : index
    %195 = vector.load %arg6[%c3, %c0_78, %c0_79] : memref<4x8x1xf32, #tpu.memory_space<vmem>>, vector<1x8x1xf32>
    %196 = vector.shape_cast %195 : vector<1x8x1xf32> to vector<8x1xf32>
    %197 = vector.broadcast %196 : vector<8x1xf32> to vector<8x2xf32>
    %198 = arith.addf %194, %197 : vector<8x2xf32>
    %cst_80 = arith.constant 0.000000e+00 : f32
    %199 = vector.broadcast %cst_80 : f32 to vector<8x2xf32>
    %200 = arith.maximumf %198, %199 : vector<8x2xf32>
    %c40 = arith.constant 40 : index
    %c0_81 = arith.constant 0 : index
    %201 = vector.load %arg3[%c40, %c0_81] : memref<48x40xbf16, #tpu.memory_space<vmem>>, vector<8x8xbf16>
    %cst_82 = arith.constant dense<0.000000e+00> : vector<8x2xf32>
    %202 = tpu.matmul %201, %200, %cst_82 {dimension_numbers = #tpu.dot_dimension_numbers<[1], [0], [0], [1], [0, 0, 1, 1], [], []>} : vector<8x8xbf16>, vector<8x2xf32>, vector<8x2xf32> -> vector<8x2xf32>
    %c2_83 = arith.constant 2 : index
    %c0_84 = arith.constant 0 : index
    %c0_85 = arith.constant 0 : index
    %203 = vector.load %arg6[%c2_83, %c0_84, %c0_85] : memref<4x8x1xf32, #tpu.memory_space<vmem>>, vector<1x8x1xf32>
    %204 = vector.shape_cast %203 : vector<1x8x1xf32> to vector<8x1xf32>
    %205 = vector.broadcast %204 : vector<8x1xf32> to vector<8x2xf32>
    %206 = arith.addf %202, %205 : vector<8x2xf32>
    %c8_86 = arith.constant 8 : index
    %c0_87 = arith.constant 0 : index
    %207 = vector.load %arg3[%c8_86, %c0_87] : memref<48x40xbf16, #tpu.memory_space<vmem>>, vector<8x40xbf16>
    %c0_88 = arith.constant 0 : index
    %c0_89 = arith.constant 0 : index
    %208 = vector.load %arg8[%c0_88, %c0_89] : memref<40x512xbf16, #tpu.memory_space<vmem>>, vector<40x512xbf16>
    %cst_90 = arith.constant dense<0.000000e+00> : vector<8x512xf32>
    %209 = tpu.matmul %207, %208, %cst_90 {dimension_numbers = #tpu.dot_dimension_numbers<[1], [0], [0], [1], [0, 0, 1, 1], [], []>} : vector<8x40xbf16>, vector<40x512xbf16>, vector<8x512xf32> -> vector<8x512xf32>
    %210 = vector.extract_strided_slice %206 {offsets = [0, 0], sizes = [8, 1], strides = [1, 1]} : vector<8x2xf32> to vector<8x1xf32>
    %211 = vector.broadcast %210 : vector<8x1xf32> to vector<8x512xf32>
    %212 = vector.broadcast %4 : vector<1x512xf32> to vector<8x512xf32>
    %213 = arith.mulf %211, %212 : vector<8x512xf32>
    %214 = vector.extract_strided_slice %206 {offsets = [0, 1], sizes = [8, 1], strides = [1, 1]} : vector<8x2xf32> to vector<8x1xf32>
    %215 = vector.broadcast %214 : vector<8x1xf32> to vector<8x512xf32>
    %216 = vector.broadcast %6 : vector<1x512xf32> to vector<8x512xf32>
    %217 = arith.mulf %215, %216 : vector<8x512xf32>
    %218 = arith.addf %213, %217 : vector<8x512xf32>
    %219 = arith.addf %209, %218 : vector<8x512xf32>
    %cst_91 = arith.constant 0.000000e+00 : f32
    %220 = vector.broadcast %cst_91 : f32 to vector<8x512xf32>
    %221 = arith.maximumf %219, %220 : vector<8x512xf32>
    %222 = arith.addf %221, %17 : vector<8x512xf32>
    %c0_92 = arith.constant 0 : index
    %c0_93 = arith.constant 0 : index
    %223 = vector.load %arg7[%c0_92, %c0_93] : memref<8x512xf32, #tpu.memory_space<vmem>>, vector<8x512xf32>
    tpu.vector_store %arg7[%c0_92, %c0_93], %222 {strides = array<i32>} : memref<8x512xf32, #tpu.memory_space<vmem>>, vector<8x512xf32>,
    return
  }
  func.func @transform_0(%arg0: i32) -> (i32, i32) {
    %c0_i32 = arith.constant 0 : i32
    %c0_i32_0 = arith.constant 0 : i32
    %c0_i32_1 = arith.constant 0 : i32
    return %c0_i32, %c0_i32_0 : i32, i32
  }
  func.func @transform_1(%arg0: i32) -> (i32, i32) {
    %c0_i32 = arith.constant 0 : i32
    %c0_i32_0 = arith.constant 0 : i32
    %c0_i32_1 = arith.constant 0 : i32
    return %c0_i32, %c0_i32_0 : i32, i32
  }
  func.func @transform_2(%arg0: i32) -> (i32, i32) {
    %c0_i32 = arith.constant 0 : i32
    %c0_i32_0 = arith.constant 0 : i32
    %c0_i32_1 = arith.constant 0 : i32
    return %c0_i32, %c0_i32_0 : i32, i32
  }
  func.func @transform_3(%arg0: i32) -> (i32, i32, i32) {
    %c0_i32 = arith.constant 0 : i32
    %c0_i32_0 = arith.constant 0 : i32
    %c0_i32_1 = arith.constant 0 : i32
    %c0_i32_2 = arith.constant 0 : i32
    return %c0_i32, %c0_i32_0, %c0_i32_1 : i32, i32, i32
  }
  func.func @transform_4(%arg0: i32) -> (i32, i32, i32) {
    %c0_i32 = arith.constant 0 : i32
    %c0_i32_0 = arith.constant 0 : i32
    %c0_i32_1 = arith.constant 0 : i32
    %c0_i32_2 = arith.constant 0 : i32
    return %c0_i32, %c0_i32_0, %c0_i32_1 : i32, i32, i32
  }
  func.func @transform_5(%arg0: i32) -> (i32, i32, i32) {
    %c0_i32 = arith.constant 0 : i32
    %c0_i32_0 = arith.constant 0 : i32
    %c0_i32_1 = arith.constant 0 : i32
    %c0_i32_2 = arith.constant 0 : i32
    return %c0_i32, %c0_i32_0, %c0_i32_1 : i32, i32, i32
  }
  func.func @transform_6(%arg0: i32) -> (i32, i32) {
    %c0_i32 = arith.constant 0 : i32
    %c0_i32_0 = arith.constant 0 : i32
    %c0_i32_1 = arith.constant 0 : i32
    return %c0_i32, %c0_i32_0 : i32, i32
  }
}

</mosaic_0001>

<llo_original>
// kernel: hfsm_forward.1
$region0: #{hfsm_forward.1}
  #allocation0 [shape = 'u32[]', space=smem, size = 0x4, offset = 0x4, fixed_abs, tag = 'smem constant byte address 0x4 - core index']
  #allocation1 [shape = 'u32[144,128]{1,0:T(1,128)}', space=vmem, size = 0x12000, scoped, tag = 'internal scratch']
  #allocation2 [shape = 'bf16[40,512]{1,0:T(8,128)(2,1)}', space=vmem, size = 0xa000, scoped, tag = 'scratch operand']
  %s0 = inlined_call_operand.vmem [shape: bf16[120,512], index: 0, kind: input, shape index: {}]
  %s1 = inlined_call_operand.vmem [shape: bf16[40,120], index: 1, kind: input, shape index: {}]
  %s2 = inlined_call_operand.vmem [shape: bf16[48,40], index: 2, kind: input, shape index: {}]
  %s3 = inlined_call_operand.vmem [shape: f32[3,2,8], index: 3, kind: input, shape index: {}]
  %s4 = inlined_call_operand.vmem [shape: f32[3,8,2], index: 4, kind: input, shape index: {}]
  %s5 = inlined_call_operand.vmem [shape: f32[4,8,1], index: 5, kind: input, shape index: {}]
  %s6 = inlined_call_operand.vmem [shape: f32[8,512], index: 6, kind: output, shape index: {}]
  %s7 = sld [smem:[#allocation0]]
  $region34: #{hfsm_forward.1} parent=0
    _
  %s9 = ssub.s32 1, %s7
  %s10 = scalar_select 0, %s9, %s7
  // Predicated region
  $region2: #{hfsm_forward.1} parent=0 // pred_check
    _
  $region3: #{hfsm_forward.1} parent=0 // pred_check_branch
    %12 = sbr.rel (0) target = $region5
  $region4: #{hfsm_forward.1} parent=0 // pred_region
    _
  $region5: #{hfsm_forward.1} parent=0 // pred_fallthru
    _
  // Predicated region
  $region6: #{hfsm_forward.1} parent=0 // pred_check
    _
  $region7: #{hfsm_forward.1} parent=0 // pred_check_branch
    %14 = sbr.rel (0) target = $region9
  $region8: #{hfsm_forward.1} parent=0 // pred_region
    _
  $region9: #{hfsm_forward.1} parent=0 // pred_fallthru
    _
  // Predicated region
  $region10: #{hfsm_forward.1} parent=0 // pred_check
    _
  $region11: #{hfsm_forward.1} parent=0 // pred_check_branch
    %16 = sbr.rel (0) target = $region13
  $region12: #{hfsm_forward.1} parent=0 // pred_region
    _
  $region13: #{hfsm_forward.1} parent=0 // pred_fallthru
    _
  // Predicated region
  $region14: #{hfsm_forward.1} parent=0 // pred_check
    _
  $region15: #{hfsm_forward.1} parent=0 // pred_check_branch
    %18 = sbr.rel (0) target = $region17
  $region16: #{hfsm_forward.1} parent=0 // pred_region
    _
  $region17: #{hfsm_forward.1} parent=0 // pred_fallthru
    _
  // Predicated region
  $region18: #{hfsm_forward.1} parent=0 // pred_check
    _
  $region19: #{hfsm_forward.1} parent=0 // pred_check_branch
    %20 = sbr.rel (0) target = $region21
  $region20: #{hfsm_forward.1} parent=0 // pred_region
    _
  $region21: #{hfsm_forward.1} parent=0 // pred_fallthru
    _
  // Predicated region
  $region22: #{hfsm_forward.1} parent=0 // pred_check
    _
  $region23: #{hfsm_forward.1} parent=0 // pred_check_branch
    %22 = sbr.rel (0) target = $region25
  $region24: #{hfsm_forward.1} parent=0 // pred_region
    _
  $region25: #{hfsm_forward.1} parent=0 // pred_fallthru
    _
  %v24 = vlaneseq
  %v25 = vand.u32 %v24, 127
  %v26 = vadd.s32 %v25, 128
  %v27 = vadd.s32 %v25, 256
  %v28 = vadd.s32 %v25, 384
  %vm29 = vcmp.lt.s32.totalorder %v25, 256
  %vm30 = vcmp.lt.s32.totalorder %v26, 256
  %vm31 = vcmp.lt.s32.totalorder %v27, 256
  %vm32 = vcmp.lt.s32.totalorder %v28, 256
  %v33 = vsel %vm29, 1, 0
  %v34 = vsel %vm30, 1, 0
  %v35 = vsel %vm31, 1, 0
  %v36 = vsel %vm32, 1, 0
  %v37 = vcvt.s32.f32 %v33
  %v38 = vcvt.s32.f32 %v34
  %v39 = vcvt.s32.f32 %v35
  %v40 = vcvt.s32.f32 %v36
  %v41 = vsub.f32 1.0, %v37
  %v42 = vsub.f32 1.0, %v38
  %v43 = vsub.f32 1.0, %v39
  %v44 = vsub.f32 1.0, %v40
  %v45 = vld [vmem:[%s1] sm:$0xf]
  %v46 = vld [vmem:[%s1 + $0x4] sm:$0xf]
  %v47 = vld [vmem:[%s1 + $0x8] sm:$0xf]
  %v48 = vld [vmem:[%s1 + $0xc] sm:$0xf]
  %v49 = vld [vmem:[%s1 + $0x10] sm:$0xf]
  %v50 = vld [vmem:[%s0] sm:$0xff]
  %v51 = vld [vmem:[%s0 + $0x8] sm:$0xff]
  %v52 = vld [vmem:[%s0 + $0x10] sm:$0xff]
  %v53 = vld [vmem:[%s0 + $0x18] sm:$0xff]
  %v54 = vld [vmem:[%s0 + $0x20] sm:$0xff]
  %v55 = vld [vmem:[%s0 + $0x28] sm:$0xff]
  %v56 = vld [vmem:[%s0 + $0x30] sm:$0xff]
  %v57 = vld [vmem:[%s0 + $0x38] sm:$0xff]
  %v58 = vld [vmem:[%s0 + $0x40] sm:$0xff]
  %v59 = vld [vmem:[%s0 + $0x48] sm:$0xff]
  %v60 = vld [vmem:[%s0 + $0x50] sm:$0xff]
  %v61 = vld [vmem:[%s0 + $0x58] sm:$0xff]
  %v62 = vld [vmem:[%s0 + $0x60] sm:$0xff]
  %v63 = vld [vmem:[%s0 + $0x68] sm:$0xff]
  %v64 = vld [vmem:[%s0 + $0x70] sm:$0xff]
  %v65 = vld [vmem:[%s0 + $0x78] sm:$0xff]
  %v66 = vld [vmem:[%s0 + $0x80] sm:$0xff]
  %v67 = vld [vmem:[%s0 + $0x88] sm:$0xff]
  %v68 = vld [vmem:[%s0 + $0x90] sm:$0xff]
  %v69 = vld [vmem:[%s0 + $0x98] sm:$0xff]
  %v70 = vld [vmem:[%s0 + $0xa0] sm:$0xff]
  %v71 = vld [vmem:[%s0 + $0xa8] sm:$0xff]
  %v72 = vld [vmem:[%s0 + $0xb0] sm:$0xff]
  %v73 = vld [vmem:[%s0 + $0xb8] sm:$0xff]
  %v74 = vld [vmem:[%s0 + $0xc0] sm:$0xff]
  %v75 = vld [vmem:[%s0 + $0xc8] sm:$0xff]
  %v76 = vld [vmem:[%s0 + $0xd0] sm:$0xff]
  %v77 = vld [vmem:[%s0 + $0xd8] sm:$0xff]
  %v78 = vld [vmem:[%s0 + $0xe0] sm:$0xff]
  %v79 = vld [vmem:[%s0 + $0xe8] sm:$0xff]
  %v85 = vunpack.c.l.b16 %v45
  %v86 = vunpack.c.l.b16 %v46
  %v87 = vunpack.c.l.b16 %v47
  %v88 = vunpack.c.l.b16 %v48
  %v89 = vunpack.c.l.b16 %v49
  %v90 = vpack.c.b16 %v86, %v85
  %v91 = vpack.c.b16 %v88, %v87
  %v92 = vpack.c.b16 %v89, %v89
  %v123 = vunpack.c.l.b16 %v50
  %v124 = vunpack.c.h.b16 %v50
  %v125 = vunpack.c.l.b16 %v51
  %v126 = vunpack.c.h.b16 %v51
  %v127 = vunpack.c.l.b16 %v52
  %v128 = vunpack.c.h.b16 %v52
  %v129 = vunpack.c.l.b16 %v53
  %v130 = vunpack.c.h.b16 %v53
  %v131 = vunpack.c.l.b16 %v54
  %v132 = vunpack.c.h.b16 %v54
  %v133 = vunpack.c.l.b16 %v55
  %v134 = vunpack.c.h.b16 %v55
  %v135 = vunpack.c.l.b16 %v56
  %v136 = vunpack.c.h.b16 %v56
  %v137 = vunpack.c.l.b16 %v57
  %v138 = vunpack.c.h.b16 %v57
  %v139 = vunpack.c.l.b16 %v58
  %v140 = vunpack.c.h.b16 %v58
  %v141 = vunpack.c.l.b16 %v59
  %v142 = vunpack.c.h.b16 %v59
  %v143 = vunpack.c.l.b16 %v60
  %v144 = vunpack.c.h.b16 %v60
  %v145 = vunpack.c.l.b16 %v61
  %v146 = vunpack.c.h.b16 %v61
  %v147 = vunpack.c.l.b16 %v62
  %v148 = vunpack.c.h.b16 %v62
  %v149 = vunpack.c.l.b16 %v63
  %v150 = vunpack.c.h.b16 %v63
  %v151 = vunpack.c.l.b16 %v64
  %v152 = vunpack.c.h.b16 %v64
  %v153 = vunpack.c.l.b16 %v65
  %v154 = vunpack.c.h.b16 %v65
  %v155 = vunpack.c.l.b16 %v66
  %v156 = vunpack.c.h.b16 %v66
  %v157 = vunpack.c.l.b16 %v67
  %v158 = vunpack.c.h.b16 %v67
  %v159 = vunpack.c.l.b16 %v68
  %v160 = vunpack.c.h.b16 %v68
  %v161 = vunpack.c.l.b16 %v69
  %v162 = vunpack.c.h.b16 %v69
  %v163 = vunpack.c.l.b16 %v70
  %v164 = vunpack.c.h.b16 %v70
  %v165 = vunpack.c.l.b16 %v71
  %v166 = vunpack.c.h.b16 %v71
  %v167 = vunpack.c.l.b16 %v72
  %v168 = vunpack.c.h.b16 %v72
  %v169 = vunpack.c.l.b16 %v73
  %v170 = vunpack.c.h.b16 %v73
  %v171 = vunpack.c.l.b16 %v74
  %v172 = vunpack.c.h.b16 %v74
  %v173 = vunpack.c.l.b16 %v75
  %v174 = vunpack.c.h.b16 %v75
  %v175 = vunpack.c.l.b16 %v76
  %v176 = vunpack.c.h.b16 %v76
  %v177 = vunpack.c.l.b16 %v77
  %v178 = vunpack.c.h.b16 %v77
  %v179 = vunpack.c.l.b16 %v78
  %v180 = vunpack.c.h.b16 %v78
  %v181 = vunpack.c.l.b16 %v79
  %v182 = vunpack.c.h.b16 %v79
  %v183 = vpack.c.b16 %v127, %v123
  %v184 = vpack.c.b16 %v128, %v124
  %v185 = vpack.c.b16 %v129, %v125
  %v186 = vpack.c.b16 %v130, %v126
  %v187 = vpack.c.b16 %v135, %v131
  %v188 = vpack.c.b16 %v136, %v132
  %v189 = vpack.c.b16 %v137, %v133
  %v190 = vpack.c.b16 %v138, %v134
  %v191 = vpack.c.b16 %v143, %v139
  %v192 = vpack.c.b16 %v144, %v140
  %v193 = vpack.c.b16 %v145, %v141
  %v194 = vpack.c.b16 %v146, %v142
  %v195 = vpack.c.b16 %v151, %v147
  %v196 = vpack.c.b16 %v152, %v148
  %v197 = vpack.c.b16 %v153, %v149
  %v198 = vpack.c.b16 %v154, %v150
  %v199 = vpack.c.b16 %v159, %v155
  %v200 = vpack.c.b16 %v160, %v156
  %v201 = vpack.c.b16 %v161, %v157
  %v202 = vpack.c.b16 %v162, %v158
  %v203 = vpack.c.b16 %v167, %v163
  %v204 = vpack.c.b16 %v168, %v164
  %v205 = vpack.c.b16 %v169, %v165
  %v206 = vpack.c.b16 %v170, %v166
  %v207 = vpack.c.b16 %v175, %v171
  %v208 = vpack.c.b16 %v176, %v172
  %v209 = vpack.c.b16 %v177, %v173
  %v210 = vpack.c.b16 %v178, %v174
  %v211 = vpack.c.b16 %v179, %v179
  %v212 = vpack.c.b16 %v180, %v180
  %v213 = vpack.c.b16 %v181, %v181
  %v214 = vpack.c.b16 %v182, %v182
  %vm243 = vcmask 982016
  %v245 = vsel %vm243, %v90, 0
  %v248 = vsel %vm243, %v91, 0
  %v251 = vsel %vm243, %v92, 0
  %vm253 = vcmask 1043456
  %v255 = vsel %vm253, %v211, 0
  %v258 = vsel %vm253, %v212, 0
  %v261 = vsel %vm253, %v213, 0
  %v264 = vsel %vm253, %v214, 0
  %266 = vmatprep.subr.bf16.mxu0 %v184
  %267 = vmatpush1.bf16.msra.mxu0 %v183
  %268 = vmatprep.subr.bf16.mxu0 %v188
  %269 = vmatpush1.bf16.msra.mxu0 %v187
  %270 = vmatprep.subr.bf16.mxu0 %v192
  %271 = vmatpush1.bf16.msra.mxu0 %v191
  %272 = vmatprep.subr.bf16.mxu0 %v196
  %273 = vmatpush1.bf16.msra.mxu0 %v195
  %274 = vmatprep.subr.bf16.mxu0 %v200
  %275 = vmatpush1.bf16.msra.mxu0 %v199
  %276 = vmatprep.subr.bf16.mxu0 %v204
  %277 = vmatpush1.bf16.msra.mxu0 %v203
  %278 = vmatprep.subr.bf16.mxu0 %v208
  %279 = vmatpush1.bf16.msra.mxu0 %v207
  %280 = vmatprep.subr.bf16.mxu0 %v258
  %281 = vmatpush1.bf16.msra.mxu0 %v255
  %282 = vmatprep.subr.bf16.mxu0 0
  %283 = vmatpush1.bf16.msra.mxu0 0
  %284 = vmatprep.subr.bf16.mxu0 0
  %285 = vmatpush1.bf16.msra.mxu0 0
  %286 = vmatprep.subr.bf16.mxu0 0
  %287 = vmatpush1.bf16.msra.mxu0 0
  %288 = vmatprep.subr.bf16.mxu0 0
  %289 = vmatpush1.bf16.msra.mxu0 0
  %290 = vmatprep.subr.bf16.mxu0 0
  %291 = vmatpush1.bf16.msra.mxu0 0
  %292 = vmatprep.subr.bf16.mxu0 0
  %293 = vmatpush1.bf16.msra.mxu0 0
  %294 = vmatprep.subr.bf16.mxu0 0
  %295 = vmatpush1.bf16.msra.mxu0 0
  %296 = vmatprep.subr.bf16.mxu0 0
  %297 = vmatpush1.bf16.msra.mxu0 0
  %298 = vmatprep.mubr.bf16.mxu0 0
  %299 = vmatmul.mubr.bf16.gmra.mrb[0].mxu0 %v245
  %v300 = vpop.f32.mrb[0].mxu0
  %v301 = vadd.f32 0.0, %v300
  %v302 = vpop.f32.mrb[0].mxu0
  %v303 = vadd.f32 0.0, %v302
  %v304 = vpop.f32.mrb[0].mxu0
  %v305 = vadd.f32 0.0, %v304
  %v306 = vpop.f32.mrb[0].mxu0
  %v307 = vadd.f32 0.0, %v306
  %308 = vmatprep.mubr.bf16.mxu0 0
  %309 = vmatmul.mubr.bf16.gmra.mrb[0].mxu0 %v248
  %v310 = vpop.f32.mrb[0].mxu0
  %v311 = vadd.f32 0.0, %v310
  %v312 = vpop.f32.mrb[0].mxu0
  %v313 = vadd.f32 0.0, %v312
  %v314 = vpop.f32.mrb[0].mxu0
  %v315 = vadd.f32 0.0, %v314
  %v316 = vpop.f32.mrb[0].mxu0
  %v317 = vadd.f32 0.0, %v316
  %318 = vmatprep.mubr.bf16.mxu0 0
  %319 = vmatmul.mubr.bf16.gmra.mrb[0].mxu0 %v251
  %v320 = vpop.f32.mrb[0].mxu0
  %v321 = vadd.f32 0.0, %v320
  %v322 = vpop.f32.mrb[0].mxu0
  %v323 = vadd.f32 0.0, %v322
  %v324 = vpop.f32.mrb[0].mxu0
  %v325 = vpop.f32.mrb[0].mxu0
  %326 = vdwg.mxu0
  %327 = vmatprep.subr.bf16.mxu0 %v186
  %328 = vmatpush1.bf16.msra.mxu0 %v185
  %329 = vmatprep.subr.bf16.mxu0 %v190
  %330 = vmatpush1.bf16.msra.mxu0 %v189
  %331 = vmatprep.subr.bf16.mxu0 %v194
  %332 = vmatpush1.bf16.msra.mxu0 %v193
  %333 = vmatprep.subr.bf16.mxu0 %v198
  %334 = vmatpush1.bf16.msra.mxu0 %v197
  %335 = vmatprep.subr.bf16.mxu0 %v202
  %336 = vmatpush1.bf16.msra.mxu0 %v201
  %337 = vmatprep.subr.bf16.mxu0 %v206
  %338 = vmatpush1.bf16.msra.mxu0 %v205
  %339 = vmatprep.subr.bf16.mxu0 %v210
  %340 = vmatpush1.bf16.msra.mxu0 %v209
  %341 = vmatprep.subr.bf16.mxu0 %v264
  %342 = vmatpush1.bf16.msra.mxu0 %v261
  %343 = vmatprep.subr.bf16.mxu0 0
  %344 = vmatpush1.bf16.msra.mxu0 0
  %345 = vmatprep.subr.bf16.mxu0 0
  %346 = vmatpush1.bf16.msra.mxu0 0
  %347 = vmatprep.subr.bf16.mxu0 0
  %348 = vmatpush1.bf16.msra.mxu0 0
  %349 = vmatprep.subr.bf16.mxu0 0
  %350 = vmatpush1.bf16.msra.mxu0 0
  %351 = vmatprep.subr.bf16.mxu0 0
  %352 = vmatpush1.bf16.msra.mxu0 0
  %353 = vmatprep.subr.bf16.mxu0 0
  %354 = vmatpush1.bf16.msra.mxu0 0
  %355 = vmatprep.subr.bf16.mxu0 0
  %356 = vmatpush1.bf16.msra.mxu0 0
  %357 = vmatprep.subr.bf16.mxu0 0
  %358 = vmatpush1.bf16.msra.mxu0 0
  %359 = vmatprep.mubr.bf16.mxu0 0
  %360 = vmatmul.mubr.bf16.gmra.mrb[0].mxu0 %v245
  %v361 = vpop.f32.mrb[0].mxu0
  %v362 = vadd.f32 0.0, %v361
  %v363 = vpop.f32.mrb[0].mxu0
  %v364 = vadd.f32 0.0, %v363
  %v365 = vpop.f32.mrb[0].mxu0
  %v366 = vadd.f32 0.0, %v365
  %v367 = vpop.f32.mrb[0].mxu0
  %v368 = vadd.f32 0.0, %v367
  %369 = vmatprep.mubr.bf16.mxu0 0
  %370 = vmatmul.mubr.bf16.gmra.mrb[0].mxu0 %v248
  %v371 = vpop.f32.mrb[0].mxu0
  %v372 = vadd.f32 0.0, %v371
  %v373 = vpop.f32.mrb[0].mxu0
  %v374 = vadd.f32 0.0, %v373
  %v375 = vpop.f32.mrb[0].mxu0
  %v376 = vadd.f32 0.0, %v375
  %v377 = vpop.f32.mrb[0].mxu0
  %v378 = vadd.f32 0.0, %v377
  %379 = vmatprep.mubr.bf16.mxu0 0
  %380 = vmatmul.mubr.bf16.gmra.mrb[0].mxu0 %v251
  %v381 = vpop.f32.mrb[0].mxu0
  %v382 = vadd.f32 0.0, %v381
  %v383 = vpop.f32.mrb[0].mxu0
  %v384 = vadd.f32 0.0, %v383
  %v385 = vpop.f32.mrb[0].mxu0
  %v386 = vpop.f32.mrb[0].mxu0
  %387 = vdwg.mxu0
  %v388 = vmax.f32 %v301, 0.0
  %v389 = vmax.f32 %v303, 0.0
  %v390 = vmax.f32 %v362, 0.0
  %v391 = vmax.f32 %v364, 0.0
  %v392 = vmax.f32 %v305, 0.0
  %v393 = vmax.f32 %v307, 0.0
  %v394 = vmax.f32 %v366, 0.0
  %v395 = vmax.f32 %v368, 0.0
  %v396 = vmax.f32 %v311, 0.0
  %v397 = vmax.f32 %v313, 0.0
  %v398 = vmax.f32 %v372, 0.0
  %v399 = vmax.f32 %v374, 0.0
  %v400 = vmax.f32 %v315, 0.0
  %v401 = vmax.f32 %v317, 0.0
  %v402 = vmax.f32 %v376, 0.0
  %v403 = vmax.f32 %v378, 0.0
  %v404 = vmax.f32 %v321, 0.0
  %v405 = vmax.f32 %v323, 0.0
  %v406 = vmax.f32 %v382, 0.0
  %v407 = vmax.f32 %v384, 0.0
  %v408 = vpack.c.bf16 %v400, %v400
  %v409 = vpack.c.bf16 %v401, %v401
  %v410 = vpack.c.bf16 %v402, %v402
  %v411 = vpack.c.bf16 %v403, %v403
  %v416 = vunpack.c.l.b16 %v408
  %v417 = vunpack.c.l.b16 %v409
  %v418 = vunpack.c.l.b16 %v410
  %v419 = vunpack.c.l.b16 %v411
  %v420 = vpack.c.b16 %v417, %v416
  %v421 = vpack.c.b16 %v419, %v418
  %424 = vst [vmem:[#allocation2 + $0x20] sm:$0xff] %v420
  %425 = vst [vmem:[#allocation2 + $0x28] sm:$0xff] %v421
  %v426 = vpack.c.bf16 %v388, %v388
  %v427 = vpack.c.bf16 %v389, %v389
  %v428 = vpack.c.bf16 %v390, %v390
  %v429 = vpack.c.bf16 %v391, %v391
  %v434 = vunpack.c.l.b16 %v426
  %v435 = vunpack.c.l.b16 %v427
  %v436 = vunpack.c.l.b16 %v428
  %v437 = vunpack.c.l.b16 %v429
  %v438 = vpack.c.b16 %v435, %v434
  %v439 = vpack.c.b16 %v437, %v436
  %442 = vst [vmem:[#allocation2 + $0x30] sm:$0xff] %v438
  %443 = vst [vmem:[#allocation2 + $0x38] sm:$0xff] %v439
  %v444 = vmul.f32 %v392, %v37
  %v445 = vmul.f32 %v393, %v38
  %v446 = vmul.f32 %v394, %v39
  %v447 = vmul.f32 %v395, %v40
  %v448 = vadd.f32 %v444, %v445
  %v449 = vadd.f32 %v448, %v446
  %v450 = vadd.f32 %v449, %v447
  %451 = vadd.xlane.f32.xlu0 %v450
  %v452 = vpop.xlane.xlu0 %451
  %v453 = vadd.f32 %v392, %v393
  %v454 = vadd.f32 %v453, %v394
  %v455 = vadd.f32 %v454, %v395
  %456 = vadd.xlane.f32.xlu0 %v455
  %v457 = vpop.xlane.xlu0 %456
  %v458 = vsub.f32 %v457, %v452
  %vm459 = vcmp.eq.s32.totalorder %v25, 0
  %v460 = vsel %vm459, 1, 0
  %vm461 = vcmp.eq.s32.totalorder %v460, 1
  %v462 = vsel %vm461, %v452, %v458
  %v463 = vmul.f32 %v462, 0.00390625
  %v464 = vld [vmem:[%s3] sm:$0x3]
  %vm465 = vcmask 64512
  %v467 = vsel %vm465, %v464, 0
  %469 = vmatprep.subr.mxu0 0.0
  %470 = vmatpush1.msra.mxu0 %v463
  %471 = vmatprep.subr.mxu0 0.0
  %472 = vmatpush1.msra.mxu0 0.0
  %473 = vmatprep.subr.mxu0 0.0
  %474 = vmatpush1.msra.mxu0 0.0
  %475 = vmatprep.subr.mxu0 0.0
  %476 = vmatpush1.msra.mxu0 0.0
  %477 = vmatprep.subr.mxu0 0.0
  %478 = vmatpush1.msra.mxu0 0.0
  %479 = vmatprep.subr.mxu0 0.0
  %480 = vmatpush1.msra.mxu0 0.0
  %481 = vmatprep.subr.mxu0 0.0
  %482 = vmatpush1.msra.mxu0 0.0
  %483 = vmatprep.subr.mxu0 0.0
  %484 = vmatpush1.msra.mxu0 0.0
  %485 = vmatprep.subr.mxu0 0.0
  %486 = vmatpush1.msra.mxu0 0.0
  %487 = vmatprep.subr.mxu0 0.0
  %488 = vmatpush1.msra.mxu0 0.0
  %489 = vmatprep.subr.mxu0 0.0
  %490 = vmatpush1.msra.mxu0 0.0
  %491 = vmatprep.subr.mxu0 0.0
  %492 = vmatpush1.msra.mxu0 0.0
  %493 = vmatprep.subr.mxu0 0.0
  %494 = vmatpush1.msra.mxu0 0.0
  %495 = vmatprep.subr.mxu0 0.0
  %496 = vmatpush1.msra.mxu0 0.0
  %497 = vmatprep.subr.mxu0 0.0
  %498 = vmatpush1.msra.mxu0 0.0
  %499 = vmatprep.subr.mxu0 0.0
  %500 = vmatpush1.msra.mxu0 0.0
  %501 = vmatprep.subr.mxu0 0.0
  %502 = vmatpush1.msra.mxu0 0.0
  %503 = vmatprep.subr.mxu0 0.0
  %504 = vmatpush1.msra.mxu0 0.0
  %505 = vmatprep.subr.mxu0 0.0
  %506 = vmatpush1.msra.mxu0 0.0
  %507 = vmatprep.subr.mxu0 0.0
  %508 = vmatpush1.msra.mxu0 0.0
  %509 = vmatprep.subr.mxu0 0.0
  %510 = vmatpush1.msra.mxu0 0.0
  %511 = vmatprep.subr.mxu0 0.0
  %512 = vmatpush1.msra.mxu0 0.0
  %513 = vmatprep.subr.mxu0 0.0
  %514 = vmatpush1.msra.mxu0 0.0
  %515 = vmatprep.subr.mxu0 0.0
  %516 = vmatpush1.msra.mxu0 0.0
  %517 = vmatprep.subr.mxu0 0.0
  %518 = vmatpush1.msra.mxu0 0.0
  %519 = vmatprep.subr.mxu0 0.0
  %520 = vmatpush1.msra.mxu0 0.0
  %521 = vmatprep.subr.mxu0 0.0
  %522 = vmatpush1.msra.mxu0 0.0
  %523 = vmatprep.subr.mxu0 0.0
  %524 = vmatpush1.msra.mxu0 0.0
  %525 = vmatprep.subr.mxu0 0.0
  %526 = vmatpush1.msra.mxu0 0.0
  %527 = vmatprep.subr.mxu0 0.0
  %528 = vmatpush1.msra.mxu0 0.0
  %529 = vmatprep.subr.mxu0 0.0
  %530 = vmatpush1.msra.mxu0 0.0
  %531 = vmatprep.subr.mxu0 0.0
  %532 = vmatpush1.msra.mxu0 0.0
  %533 = vmatprep.mubr.f32.mxu0 0.0
  %534 = vmatmul.mubr.f32.gmra.mrb[0].mxu0 %v467
  %v535 = vpop.f32.mrb[0].mxu0
  %v536 = vadd.f32 0.0, %v535
  %v537 = vpop.f32.mrb[0].mxu0
  %538 = vdwg.mxu0
  %v539 = vmax.f32 %v536, 0.0
  %v540 = vld [vmem:[%s4] sm:$0xff]
  %vm541 = vcmask 15360
  %v543 = vsel %vm541, %v540, 0
  %vm545 = vcmask 1041408
  %v547 = vsel %vm545, %v539, 0
  %549 = vmatprep.subr.mxu0 0.0
  %550 = vmatpush1.msra.mxu0 %v547
  %551 = vmatprep.subr.mxu0 0.0
  %552 = vmatpush1.msra.mxu0 0.0
  %553 = vmatprep.subr.mxu0 0.0
  %554 = vmatpush1.msra.mxu0 0.0
  %555 = vmatprep.subr.mxu0 0.0
  %556 = vmatpush1.msra.mxu0 0.0
  %557 = vmatprep.subr.mxu0 0.0
  %558 = vmatpush1.msra.mxu0 0.0
  %559 = vmatprep.subr.mxu0 0.0
  %560 = vmatpush1.msra.mxu0 0.0
  %561 = vmatprep.subr.mxu0 0.0
  %562 = vmatpush1.msra.mxu0 0.0
  %563 = vmatprep.subr.mxu0 0.0
  %564 = vmatpush1.msra.mxu0 0.0
  %565 = vmatprep.subr.mxu0 0.0
  %566 = vmatpush1.msra.mxu0 0.0
  %567 = vmatprep.subr.mxu0 0.0
  %568 = vmatpush1.msra.mxu0 0.0
  %569 = vmatprep.subr.mxu0 0.0
  %570 = vmatpush1.msra.mxu0 0.0
  %571 = vmatprep.subr.mxu0 0.0
  %572 = vmatpush1.msra.mxu0 0.0
  %573 = vmatprep.subr.mxu0 0.0
  %574 = vmatpush1.msra.mxu0 0.0
  %575 = vmatprep.subr.mxu0 0.0
  %576 = vmatpush1.msra.mxu0 0.0
  %577 = vmatprep.subr.mxu0 0.0
  %578 = vmatpush1.msra.mxu0 0.0
  %579 = vmatprep.subr.mxu0 0.0
  %580 = vmatpush1.msra.mxu0 0.0
  %581 = vmatprep.subr.mxu0 0.0
  %582 = vmatpush1.msra.mxu0 0.0
  %583 = vmatprep.subr.mxu0 0.0
  %584 = vmatpush1.msra.mxu0 0.0
  %585 = vmatprep.subr.mxu0 0.0
  %586 = vmatpush1.msra.mxu0 0.0
  %587 = vmatprep.subr.mxu0 0.0
  %588 = vmatpush1.msra.mxu0 0.0
  %589 = vmatprep.subr.mxu0 0.0
  %590 = vmatpush1.msra.mxu0 0.0
  %591 = vmatprep.subr.mxu0 0.0
  %592 = vmatpush1.msra.mxu0 0.0
  %593 = vmatprep.subr.mxu0 0.0
  %594 = vmatpush1.msra.mxu0 0.0
  %595 = vmatprep.subr.mxu0 0.0
  %596 = vmatpush1.msra.mxu0 0.0
  %597 = vmatprep.subr.mxu0 0.0
  %598 = vmatpush1.msra.mxu0 0.0
  %599 = vmatprep.subr.mxu0 0.0
  %600 = vmatpush1.msra.mxu0 0.0
  %601 = vmatprep.subr.mxu0 0.0
  %602 = vmatpush1.msra.mxu0 0.0
  %603 = vmatprep.subr.mxu0 0.0
  %604 = vmatpush1.msra.mxu0 0.0
  %605 = vmatprep.subr.mxu0 0.0
  %606 = vmatpush1.msra.mxu0 0.0
  %607 = vmatprep.subr.mxu0 0.0
  %608 = vmatpush1.msra.mxu0 0.0
  %609 = vmatprep.subr.mxu0 0.0
  %610 = vmatpush1.msra.mxu0 0.0
  %611 = vmatprep.subr.mxu0 0.0
  %612 = vmatpush1.msra.mxu0 0.0
  %613 = vmatprep.mubr.f32.mxu0 0.0
  %614 = vmatmul.mubr.f32.gmra.mrb[0].mxu0 %v543
  %v615 = vpop.f32.mrb[0].mxu0
  %v616 = vadd.f32 0.0, %v615
  %v617 = vpop.f32.mrb[0].mxu0
  %618 = vdwg.mxu0
  %v619 = vxor.u32 %v616, 2147483648
  %v620 = vmul.f32 %v619, 1.442695
  %v621 = vpow.pop %v620
  %v622 = vadd.f32 %v621, 1.0
  %v623 = vrcp.pop %v622
  %v624 = vmul.f32 1.0, %v623
  %626 = vset.pattern.permute.xlu0 0
  %627 = vperm.xlu0 %626, %v624
  %v628 = vpop.permute.xlu0 %627
  %v630 = vmul.f32 %v628, %v37
  %v631 = vmul.f32 %v628, %v38
  %v632 = vmul.f32 %v628, %v39
  %v633 = vmul.f32 %v628, %v40
  %634 = vset.pattern.permute.xlu0 1
  %635 = vperm.xlu0 %634, %v624
  %v636 = vpop.permute.xlu0 %635
  %v638 = vmul.f32 %v636, %v41
  %v639 = vmul.f32 %v636, %v42
  %v640 = vmul.f32 %v636, %v43
  %v641 = vmul.f32 %v636, %v44
  %v642 = vadd.f32 %v630, %v638
  %v643 = vadd.f32 %v631, %v639
  %v644 = vadd.f32 %v632, %v640
  %v645 = vadd.f32 %v633, %v641
  %v646 = vmul.f32 %v392, %v642
  %v647 = vmul.f32 %v393, %v643
  %v648 = vmul.f32 %v394, %v644
  %v649 = vmul.f32 %v395, %v645
  %v650 = vpack.c.bf16 %v646, %v646
  %v651 = vpack.c.bf16 %v647, %v647
  %v652 = vpack.c.bf16 %v648, %v648
  %v653 = vpack.c.bf16 %v649, %v649
  %v658 = vunpack.c.l.b16 %v650
  %v659 = vunpack.c.l.b16 %v651
  %v660 = vunpack.c.l.b16 %v652
  %v661 = vunpack.c.l.b16 %v653
  %v662 = vpack.c.b16 %v659, %v658
  %v663 = vpack.c.b16 %v661, %v660
  %666 = vst [vmem:[#allocation2] sm:$0xff] %v662
  %667 = vst [vmem:[#allocation2 + $0x8] sm:$0xff] %v663
  %v668 = vld [vmem:[%s2 + $0x8] sm:$0xf]
  %v669 = vld [vmem:[%s2 + $0xc] sm:$0xf]
  %v670 = vpack.c.bf16 %v396, %v396
  %v671 = vpack.c.bf16 %v397, %v397
  %v672 = vpack.c.bf16 %v398, %v398
  %v673 = vpack.c.bf16 %v399, %v399
  %v675 = vsel %vm465, %v669, 0
  %v678 = vsel %vm253, %v670, 0
  %v681 = vsel %vm253, %v671, 0
  %v684 = vsel %vm253, %v672, 0
  %v687 = vsel %vm253, %v673, 0
  %689 = vmatprep.subr.bf16.mxu0 %v681
  %690 = vmatpush1.bf16.msra.mxu0 %v678
  %691 = vmatprep.subr.bf16.mxu0 0
  %692 = vmatpush1.bf16.msra.mxu0 0
  %693 = vmatprep.subr.bf16.mxu0 0
  %694 = vmatpush1.bf16.msra.mxu0 0
  %695 = vmatprep.subr.bf16.mxu0 0
  %696 = vmatpush1.bf16.msra.mxu0 0
  %697 = vmatprep.subr.bf16.mxu0 0
  %698 = vmatpush1.bf16.msra.mxu0 0
  %699 = vmatprep.subr.bf16.mxu0 0
  %700 = vmatpush1.bf16.msra.mxu0 0
  %701 = vmatprep.subr.bf16.mxu0 0
  %702 = vmatpush1.bf16.msra.mxu0 0
  %703 = vmatprep.subr.bf16.mxu0 0
  %704 = vmatpush1.bf16.msra.mxu0 0
  %705 = vmatprep.subr.bf16.mxu0 0
  %706 = vmatpush1.bf16.msra.mxu0 0
  %707 = vmatprep.subr.bf16.mxu0 0
  %708 = vmatpush1.bf16.msra.mxu0 0
  %709 = vmatprep.subr.bf16.mxu0 0
  %710 = vmatpush1.bf16.msra.mxu0 0
  %711 = vmatprep.subr.bf16.mxu0 0
  %712 = vmatpush1.bf16.msra.mxu0 0
  %713 = vmatprep.subr.bf16.mxu0 0
  %714 = vmatpush1.bf16.msra.mxu0 0
  %715 = vmatprep.subr.bf16.mxu0 0
  %716 = vmatpush1.bf16.msra.mxu0 0
  %717 = vmatprep.subr.bf16.mxu0 0
  %718 = vmatpush1.bf16.msra.mxu0 0
  %719 = vmatprep.subr.bf16.mxu0 0
  %720 = vmatpush1.bf16.msra.mxu0 0
  %721 = vmatprep.mubr.bf16.mxu0 0
  %722 = vmatmul.mubr.bf16.gmra.mrb[0].mxu0 %v675
  %v723 = vpop.f32.mrb[0].mxu0
  %v724 = vadd.f32 0.0, %v723
  %v725 = vpop.f32.mrb[0].mxu0
  %v726 = vadd.f32 0.0, %v725
  %v727 = vpop.f32.mrb[0].mxu0
  %v728 = vpop.f32.mrb[0].mxu0
  %729 = vdwg.mxu0
  %730 = vmatprep.subr.bf16.mxu0 %v687
  %731 = vmatpush1.bf16.msra.mxu0 %v684
  %732 = vmatprep.subr.bf16.mxu0 0
  %733 = vmatpush1.bf16.msra.mxu0 0
  %734 = vmatprep.subr.bf16.mxu0 0
  %735 = vmatpush1.bf16.msra.mxu0 0
  %736 = vmatprep.subr.bf16.mxu0 0
  %737 = vmatpush1.bf16.msra.mxu0 0
  %738 = vmatprep.subr.bf16.mxu0 0
  %739 = vmatpush1.bf16.msra.mxu0 0
  %740 = vmatprep.subr.bf16.mxu0 0
  %741 = vmatpush1.bf16.msra.mxu0 0
  %742 = vmatprep.subr.bf16.mxu0 0
  %743 = vmatpush1.bf16.msra.mxu0 0
  %744 = vmatprep.subr.bf16.mxu0 0
  %745 = vmatpush1.bf16.msra.mxu0 0
  %746 = vmatprep.subr.bf16.mxu0 0
  %747 = vmatpush1.bf16.msra.mxu0 0
  %748 = vmatprep.subr.bf16.mxu0 0
  %749 = vmatpush1.bf16.msra.mxu0 0
  %750 = vmatprep.subr.bf16.mxu0 0
  %751 = vmatpush1.bf16.msra.mxu0 0
  %752 = vmatprep.subr.bf16.mxu0 0
  %753 = vmatpush1.bf16.msra.mxu0 0
  %754 = vmatprep.subr.bf16.mxu0 0
  %755 = vmatpush1.bf16.msra.mxu0 0
  %756 = vmatprep.subr.bf16.mxu0 0
  %757 = vmatpush1.bf16.msra.mxu0 0
  %758 = vmatprep.subr.bf16.mxu0 0
  %759 = vmatpush1.bf16.msra.mxu0 0
  %760 = vmatprep.subr.bf16.mxu0 0
  %761 = vmatpush1.bf16.msra.mxu0 0
  %762 = vmatprep.mubr.bf16.mxu0 0
  %763 = vmatmul.mubr.bf16.gmra.mrb[0].mxu0 %v675
  %v764 = vpop.f32.mrb[0].mxu0
  %v765 = vadd.f32 0.0, %v764
  %v766 = vpop.f32.mrb[0].mxu0
  %v767 = vadd.f32 0.0, %v766
  %v768 = vpop.f32.mrb[0].mxu0
  %v769 = vpop.f32.mrb[0].mxu0
  %770 = vdwg.mxu0
  %v772 = vsel %vm465, %v668, 0
  %v775 = vsel %vm253, %v650, 0
  %v778 = vsel %vm253, %v651, 0
  %v781 = vsel %vm253, %v652, 0
  %v784 = vsel %vm253, %v653, 0
  %786 = vmatprep.subr.bf16.mxu0 %v778
  %787 = vmatpush1.bf16.msra.mxu0 %v775
  %788 = vmatprep.subr.bf16.mxu0 0
  %789 = vmatpush1.bf16.msra.mxu0 0
  %790 = vmatprep.subr.bf16.mxu0 0
  %791 = vmatpush1.bf16.msra.mxu0 0
  %792 = vmatprep.subr.bf16.mxu0 0
  %793 = vmatpush1.bf16.msra.mxu0 0
  %794 = vmatprep.subr.bf16.mxu0 0
  %795 = vmatpush1.bf16.msra.mxu0 0
  %796 = vmatprep.subr.bf16.mxu0 0
  %797 = vmatpush1.bf16.msra.mxu0 0
  %798 = vmatprep.subr.bf16.mxu0 0
  %799 = vmatpush1.bf16.msra.mxu0 0
  %800 = vmatprep.subr.bf16.mxu0 0
  %801 = vmatpush1.bf16.msra.mxu0 0
  %802 = vmatprep.subr.bf16.mxu0 0
  %803 = vmatpush1.bf16.msra.mxu0 0
  %804 = vmatprep.subr.bf16.mxu0 0
  %805 = vmatpush1.bf16.msra.mxu0 0
  %806 = vmatprep.subr.bf16.mxu0 0
  %807 = vmatpush1.bf16.msra.mxu0 0
  %808 = vmatprep.subr.bf16.mxu0 0
  %809 = vmatpush1.bf16.msra.mxu0 0
  %810 = vmatprep.subr.bf16.mxu0 0
  %811 = vmatpush1.bf16.msra.mxu0 0
  %812 = vmatprep.subr.bf16.mxu0 0
  %813 = vmatpush1.bf16.msra.mxu0 0
  %814 = vmatprep.subr.bf16.mxu0 0
  %815 = vmatpush1.bf16.msra.mxu0 0
  %816 = vmatprep.subr.bf16.mxu0 0
  %817 = vmatpush1.bf16.msra.mxu0 0
  %818 = vmatprep.mubr.bf16.mxu0 0
  %819 = vmatmul.mubr.bf16.gmra.mrb[0].mxu0 %v772
  %v820 = vpop.f32.mrb[0].mxu0
  %v821 = vadd.f32 %v724, %v820
  %v822 = vpop.f32.mrb[0].mxu0
  %v823 = vadd.f32 %v726, %v822
  %v824 = vpop.f32.mrb[0].mxu0
  %v825 = vpop.f32.mrb[0].mxu0
  %826 = vdwg.mxu0
  %827 = vmatprep.subr.bf16.mxu0 %v784
  %828 = vmatpush1.bf16.msra.mxu0 %v781
  %829 = vmatprep.subr.bf16.mxu0 0
  %830 = vmatpush1.bf16.msra.mxu0 0
  %831 = vmatprep.subr.bf16.mxu0 0
  %832 = vmatpush1.bf16.msra.mxu0 0
  %833 = vmatprep.subr.bf16.mxu0 0
  %834 = vmatpush1.bf16.msra.mxu0 0
  %835 = vmatprep.subr.bf16.mxu0 0
  %836 = vmatpush1.bf16.msra.mxu0 0
  %837 = vmatprep.subr.bf16.mxu0 0
  %838 = vmatpush1.bf16.msra.mxu0 0
  %839 = vmatprep.subr.bf16.mxu0 0
  %840 = vmatpush1.bf16.msra.mxu0 0
  %841 = vmatprep.subr.bf16.mxu0 0
  %842 = vmatpush1.bf16.msra.mxu0 0
  %843 = vmatprep.subr.bf16.mxu0 0
  %844 = vmatpush1.bf16.msra.mxu0 0
  %845 = vmatprep.subr.bf16.mxu0 0
  %846 = vmatpush1.bf16.msra.mxu0 0
  %847 = vmatprep.subr.bf16.mxu0 0
  %848 = vmatpush1.bf16.msra.mxu0 0
  %849 = vmatprep.subr.bf16.mxu0 0
  %850 = vmatpush1.bf16.msra.mxu0 0
  %851 = vmatprep.subr.bf16.mxu0 0
  %852 = vmatpush1.bf16.msra.mxu0 0
  %853 = vmatprep.subr.bf16.mxu0 0
  %854 = vmatpush1.bf16.msra.mxu0 0
  %855 = vmatprep.subr.bf16.mxu0 0
  %856 = vmatpush1.bf16.msra.mxu0 0
  %857 = vmatprep.subr.bf16.mxu0 0
  %858 = vmatpush1.bf16.msra.mxu0 0
  %859 = vmatprep.mubr.bf16.mxu0 0
  %860 = vmatmul.mubr.bf16.gmra.mrb[0].mxu0 %v772
  %v861 = vpop.f32.mrb[0].mxu0
  %v862 = vadd.f32 %v765, %v861
  %v863 = vpop.f32.mrb[0].mxu0
  %v864 = vadd.f32 %v767, %v863
  %v865 = vpop.f32.mrb[0].mxu0
  %v866 = vpop.f32.mrb[0].mxu0
  %867 = vdwg.mxu0
  %v868 = vld [vmem:[%s5] sm:$0xff]
  %870 = vset.pattern.permute.xlu0 0
  %871 = vperm.xlu0 %870, %v868
  %v872 = vpop.permute.xlu0 %871
  %v874 = vadd.f32 %v821, %v872
  %v875 = vadd.f32 %v823, %v872
  %v876 = vadd.f32 %v862, %v872
  %v877 = vadd.f32 %v864, %v872
  %v878 = vmax.f32 %v874, 0.0
  %v879 = vmax.f32 %v875, 0.0
  %v880 = vmax.f32 %v876, 0.0
  %v881 = vmax.f32 %v877, 0.0
  %v882 = vmul.f32 %v878, %v37
  %v883 = vmul.f32 %v879, %v38
  %v884 = vmul.f32 %v880, %v39
  %v885 = vmul.f32 %v881, %v40
  %v886 = vadd.f32 %v882, %v883
  %v887 = vadd.f32 %v886, %v884
  %v888 = vadd.f32 %v887, %v885
  %889 = vadd.xlane.f32.xlu0 %v888
  %v890 = vpop.xlane.xlu0 %889
  %v891 = vadd.f32 %v878, %v879
  %v892 = vadd.f32 %v891, %v880
  %v893 = vadd.f32 %v892, %v881
  %894 = vadd.xlane.f32.xlu0 %v893
  %v895 = vpop.xlane.xlu0 %894
  %v896 = vsub.f32 %v895, %v890
  %v897 = vsel %vm461, %v890, %v896
  %v898 = vmul.f32 %v897, 0.00390625
  %s899 = scalar_lea.vmem %s3, 2
  %v900 = vld [vmem:[%s899] sm:$0x3]
  %v902 = vsel %vm465, %v900, 0
  %904 = vmatprep.subr.mxu0 0.0
  %905 = vmatpush1.msra.mxu0 %v898
  %906 = vmatprep.subr.mxu0 0.0
  %907 = vmatpush1.msra.mxu0 0.0
  %908 = vmatprep.subr.mxu0 0.0
  %909 = vmatpush1.msra.mxu0 0.0
  %910 = vmatprep.subr.mxu0 0.0
  %911 = vmatpush1.msra.mxu0 0.0
  %912 = vmatprep.subr.mxu0 0.0
  %913 = vmatpush1.msra.mxu0 0.0
  %914 = vmatprep.subr.mxu0 0.0
  %915 = vmatpush1.msra.mxu0 0.0
  %916 = vmatprep.subr.mxu0 0.0
  %917 = vmatpush1.msra.mxu0 0.0
  %918 = vmatprep.subr.mxu0 0.0
  %919 = vmatpush1.msra.mxu0 0.0
  %920 = vmatprep.subr.mxu0 0.0
  %921 = vmatpush1.msra.mxu0 0.0
  %922 = vmatprep.subr.mxu0 0.0
  %923 = vmatpush1.msra.mxu0 0.0
  %924 = vmatprep.subr.mxu0 0.0
  %925 = vmatpush1.msra.mxu0 0.0
  %926 = vmatprep.subr.mxu0 0.0
  %927 = vmatpush1.msra.mxu0 0.0
  %928 = vmatprep.subr.mxu0 0.0
  %929 = vmatpush1.msra.mxu0 0.0
  %930 = vmatprep.subr.mxu0 0.0
  %931 = vmatpush1.msra.mxu0 0.0
  %932 = vmatprep.subr.mxu0 0.0
  %933 = vmatpush1.msra.mxu0 0.0
  %934 = vmatprep.subr.mxu0 0.0
  %935 = vmatpush1.msra.mxu0 0.0
  %936 = vmatprep.subr.mxu0 0.0
  %937 = vmatpush1.msra.mxu0 0.0
  %938 = vmatprep.subr.mxu0 0.0
  %939 = vmatpush1.msra.mxu0 0.0
  %940 = vmatprep.subr.mxu0 0.0
  %941 = vmatpush1.msra.mxu0 0.0
  %942 = vmatprep.subr.mxu0 0.0
  %943 = vmatpush1.msra.mxu0 0.0
  %944 = vmatprep.subr.mxu0 0.0
  %945 = vmatpush1.msra.mxu0 0.0
  %946 = vmatprep.subr.mxu0 0.0
  %947 = vmatpush1.msra.mxu0 0.0
  %948 = vmatprep.subr.mxu0 0.0
  %949 = vmatpush1.msra.mxu0 0.0
  %950 = vmatprep.subr.mxu0 0.0
  %951 = vmatpush1.msra.mxu0 0.0
  %952 = vmatprep.subr.mxu0 0.0
  %953 = vmatpush1.msra.mxu0 0.0
  %954 = vmatprep.subr.mxu0 0.0
  %955 = vmatpush1.msra.mxu0 0.0
  %956 = vmatprep.subr.mxu0 0.0
  %957 = vmatpush1.msra.mxu0 0.0
  %958 = vmatprep.subr.mxu0 0.0
  %959 = vmatpush1.msra.mxu0 0.0
  %960 = vmatprep.subr.mxu0 0.0
  %961 = vmatpush1.msra.mxu0 0.0
  %962 = vmatprep.subr.mxu0 0.0
  %963 = vmatpush1.msra.mxu0 0.0
  %964 = vmatprep.subr.mxu0 0.0
  %965 = vmatpush1.msra.mxu0 0.0
  %966 = vmatprep.subr.mxu0 0.0
  %967 = vmatpush1.msra.mxu0 0.0
  %968 = vmatprep.mubr.f32.mxu0 0.0
  %969 = vmatmul.mubr.f32.gmra.mrb[0].mxu0 %v902
  %v970 = vpop.f32.mrb[0].mxu0
  %v971 = vadd.f32 0.0, %v970
  %v972 = vpop.f32.mrb[0].mxu0
  %973 = vdwg.mxu0
  %v974 = vmax.f32 %v971, 0.0
  %s975 = scalar_lea.vmem %s4, 8
  %v976 = vld [vmem:[%s975] sm:$0xff]
  %v978 = vsel %vm541, %v976, 0
  %v981 = vsel %vm545, %v974, 0
  %983 = vmatprep.subr.mxu0 0.0
  %984 = vmatpush1.msra.mxu0 %v981
  %985 = vmatprep.subr.mxu0 0.0
  %986 = vmatpush1.msra.mxu0 0.0
  %987 = vmatprep.subr.mxu0 0.0
  %988 = vmatpush1.msra.mxu0 0.0
  %989 = vmatprep.subr.mxu0 0.0
  %990 = vmatpush1.msra.mxu0 0.0
  %991 = vmatprep.subr.mxu0 0.0
  %992 = vmatpush1.msra.mxu0 0.0
  %993 = vmatprep.subr.mxu0 0.0
  %994 = vmatpush1.msra.mxu0 0.0
  %995 = vmatprep.subr.mxu0 0.0
  %996 = vmatpush1.msra.mxu0 0.0
  %997 = vmatprep.subr.mxu0 0.0
  %998 = vmatpush1.msra.mxu0 0.0
  %999 = vmatprep.subr.mxu0 0.0
  %1000 = vmatpush1.msra.mxu0 0.0
  %1001 = vmatprep.subr.mxu0 0.0
  %1002 = vmatpush1.msra.mxu0 0.0
  %1003 = vmatprep.subr.mxu0 0.0
  %1004 = vmatpush1.msra.mxu0 0.0
  %1005 = vmatprep.subr.mxu0 0.0
  %1006 = vmatpush1.msra.mxu0 0.0
  %1007 = vmatprep.subr.mxu0 0.0
  %1008 = vmatpush1.msra.mxu0 0.0
  %1009 = vmatprep.subr.mxu0 0.0
  %1010 = vmatpush1.msra.mxu0 0.0
  %1011 = vmatprep.subr.mxu0 0.0
  %1012 = vmatpush1.msra.mxu0 0.0
  %1013 = vmatprep.subr.mxu0 0.0
  %1014 = vmatpush1.msra.mxu0 0.0
  %1015 = vmatprep.subr.mxu0 0.0
  %1016 = vmatpush1.msra.mxu0 0.0
  %1017 = vmatprep.subr.mxu0 0.0
  %1018 = vmatpush1.msra.mxu0 0.0
  %1019 = vmatprep.subr.mxu0 0.0
  %1020 = vmatpush1.msra.mxu0 0.0
  %1021 = vmatprep.subr.mxu0 0.0
  %1022 = vmatpush1.msra.mxu0 0.0
  %1023 = vmatprep.subr.mxu0 0.0
  %1024 = vmatpush1.msra.mxu0 0.0
  %1025 = vmatprep.subr.mxu0 0.0
  %1026 = vmatpush1.msra.mxu0 0.0
  %1027 = vmatprep.subr.mxu0 0.0
  %1028 = vmatpush1.msra.mxu0 0.0
  %1029 = vmatprep.subr.mxu0 0.0
  %1030 = vmatpush1.msra.mxu0 0.0
  %1031 = vmatprep.subr.mxu0 0.0
  %1032 = vmatpush1.msra.mxu0 0.0
  %1033 = vmatprep.subr.mxu0 0.0
  %1034 = vmatpush1.msra.mxu0 0.0
  %1035 = vmatprep.subr.mxu0 0.0
  %1036 = vmatpush1.msra.mxu0 0.0
  %1037 = vmatprep.subr.mxu0 0.0
  %1038 = vmatpush1.msra.mxu0 0.0
  %1039 = vmatprep.subr.mxu0 0.0
  %1040 = vmatpush1.msra.mxu0 0.0
  %1041 = vmatprep.subr.mxu0 0.0
  %1042 = vmatpush1.msra.mxu0 0.0
  %1043 = vmatprep.subr.mxu0 0.0
  %1044 = vmatpush1.msra.mxu0 0.0
  %1045 = vmatprep.subr.mxu0 0.0
  %1046 = vmatpush1.msra.mxu0 0.0
  %1047 = vmatprep.mubr.f32.mxu0 0.0
  %1048 = vmatmul.mubr.f32.gmra.mrb[0].mxu0 %v978
  %v1049 = vpop.f32.mrb[0].mxu0
  %v1050 = vadd.f32 0.0, %v1049
  %v1051 = vpop.f32.mrb[0].mxu0
  %1052 = vdwg.mxu0
  %v1053 = vxor.u32 %v1050, 2147483648
  %v1054 = vmul.f32 %v1053, 1.442695
  %v1055 = vpow.pop %v1054
  %v1056 = vadd.f32 %v1055, 1.0
  %v1057 = vrcp.pop %v1056
  %v1058 = vmul.f32 1.0, %v1057
  %1060 = vset.pattern.permute.xlu0 0
  %1061 = vperm.xlu0 %1060, %v1058
  %v1062 = vpop.permute.xlu0 %1061
  %v1064 = vmul.f32 %v1062, %v37
  %v1065 = vmul.f32 %v1062, %v38
  %v1066 = vmul.f32 %v1062, %v39
  %v1067 = vmul.f32 %v1062, %v40
  %1068 = vset.pattern.permute.xlu0 1
  %1069 = vperm.xlu0 %1068, %v1058
  %v1070 = vpop.permute.xlu0 %1069
  %v1072 = vmul.f32 %v1070, %v41
  %v1073 = vmul.f32 %v1070, %v42
  %v1074 = vmul.f32 %v1070, %v43
  %v1075 = vmul.f32 %v1070, %v44
  %v1076 = vadd.f32 %v1064, %v1072
  %v1077 = vadd.f32 %v1065, %v1073
  %v1078 = vadd.f32 %v1066, %v1074
  %v1079 = vadd.f32 %v1067, %v1075
  %v1080 = vmul.f32 %v878, %v1076
  %v1081 = vmul.f32 %v879, %v1077
  %v1082 = vmul.f32 %v880, %v1078
  %v1083 = vmul.f32 %v881, %v1079
  %v1084 = vpack.c.bf16 %v1080, %v1080
  %v1085 = vpack.c.bf16 %v1081, %v1081
  %v1086 = vpack.c.bf16 %v1082, %v1082
  %v1087 = vpack.c.bf16 %v1083, %v1083
  %v1092 = vunpack.c.l.b16 %v1084
  %v1093 = vunpack.c.l.b16 %v1085
  %v1094 = vunpack.c.l.b16 %v1086
  %v1095 = vunpack.c.l.b16 %v1087
  %v1096 = vpack.c.b16 %v1093, %v1092
  %v1097 = vpack.c.b16 %v1095, %v1094
  %1100 = vst [vmem:[#allocation2 + $0x10] sm:$0xff] %v1096
  %1101 = vst [vmem:[#allocation2 + $0x18] sm:$0xff] %v1097
  %v1102 = vld [vmem:[%s2] sm:$0xf]
  %v1103 = vld [vmem:[#allocation2] sm:$0xff]
  %v1104 = vld [vmem:[#allocation2 + $0x8] sm:$0xff]
  %v1105 = vld [vmem:[#allocation2 + $0x10] sm:$0xff]
  %v1106 = vld [vmem:[#allocation2 + $0x18] sm:$0xff]
  %v1107 = vld [vmem:[#allocation2 + $0x20] sm:$0xff]
  %v1108 = vld [vmem:[#allocation2 + $0x28] sm:$0xff]
  %s1109 = scalar_lea.vmem %s5, 8
  %v1110 = vld [vmem:[%s1109] sm:$0xff]
  %1112 = vset.pattern.permute.xlu0 0
  %1113 = vperm.xlu0 %1112, %v1110
  %v1114 = vpop.permute.xlu0 %1113
  %v1122 = vunpack.c.l.b16 %v1103
  %v1123 = vunpack.c.h.b16 %v1103
  %v1124 = vunpack.c.l.b16 %v1104
  %v1125 = vunpack.c.h.b16 %v1104
  %v1126 = vunpack.c.l.b16 %v1105
  %v1127 = vunpack.c.h.b16 %v1105
  %v1128 = vunpack.c.l.b16 %v1106
  %v1129 = vunpack.c.h.b16 %v1106
  %v1130 = vunpack.c.l.b16 %v1107
  %v1131 = vunpack.c.h.b16 %v1107
  %v1132 = vunpack.c.l.b16 %v1108
  %v1133 = vunpack.c.h.b16 %v1108
  %v1134 = vpack.c.b16 %v1126, %v1122
  %v1135 = vpack.c.b16 %v1127, %v1123
  %v1136 = vpack.c.b16 %v1128, %v1124
  %v1137 = vpack.c.b16 %v1129, %v1125
  %v1138 = vpack.c.b16 %v1130, %v1130
  %v1139 = vpack.c.b16 %v1131, %v1131
  %v1140 = vpack.c.b16 %v1132, %v1132
  %v1141 = vpack.c.b16 %v1133, %v1133
  %vm1146 = vcmask 195584
  %v1148 = vsel %vm1146, %v1102, 0
  %v1151 = vsel %vm253, %v1138, 0
  %v1154 = vsel %vm253, %v1139, 0
  %v1157 = vsel %vm253, %v1140, 0
  %v1160 = vsel %vm253, %v1141, 0
  %1162 = vmatprep.subr.bf16.mxu0 %v1135
  %1163 = vmatpush1.bf16.msra.mxu0 %v1134
  %1164 = vmatprep.subr.bf16.mxu0 %v1154
  %1165 = vmatpush1.bf16.msra.mxu0 %v1151
  %1166 = vmatprep.subr.bf16.mxu0 0
  %1167 = vmatpush1.bf16.msra.mxu0 0
  %1168 = vmatprep.subr.bf16.mxu0 0
  %1169 = vmatpush1.bf16.msra.mxu0 0
  %1170 = vmatprep.subr.bf16.mxu0 0
  %1171 = vmatpush1.bf16.msra.mxu0 0
  %1172 = vmatprep.subr.bf16.mxu0 0
  %1173 = vmatpush1.bf16.msra.mxu0 0
  %1174 = vmatprep.subr.bf16.mxu0 0
  %1175 = vmatpush1.bf16.msra.mxu0 0
  %1176 = vmatprep.subr.bf16.mxu0 0
  %1177 = vmatpush1.bf16.msra.mxu0 0
  %1178 = vmatprep.subr.bf16.mxu0 0
  %1179 = vmatpush1.bf16.msra.mxu0 0
  %1180 = vmatprep.subr.bf16.mxu0 0
  %1181 = vmatpush1.bf16.msra.mxu0 0
  %1182 = vmatprep.subr.bf16.mxu0 0
  %1183 = vmatpush1.bf16.msra.mxu0 0
  %1184 = vmatprep.subr.bf16.mxu0 0
  %1185 = vmatpush1.bf16.msra.mxu0 0
  %1186 = vmatprep.subr.bf16.mxu0 0
  %1187 = vmatpush1.bf16.msra.mxu0 0
  %1188 = vmatprep.subr.bf16.mxu0 0
  %1189 = vmatpush1.bf16.msra.mxu0 0
  %1190 = vmatprep.subr.bf16.mxu0 0
  %1191 = vmatpush1.bf16.msra.mxu0 0
  %1192 = vmatprep.subr.bf16.mxu0 0
  %1193 = vmatpush1.bf16.msra.mxu0 0
  %1194 = vmatprep.mubr.bf16.mxu0 0
  %1195 = vmatmul.mubr.bf16.gmra.mrb[0].mxu0 %v1148
  %v1196 = vpop.f32.mrb[0].mxu0
  %v1197 = vadd.f32 %v1114, %v1196
  %v1198 = vpop.f32.mrb[0].mxu0
  %v1199 = vadd.f32 %v1114, %v1198
  %v1200 = vpop.f32.mrb[0].mxu0
  %v1201 = vpop.f32.mrb[0].mxu0
  %1202 = vdwg.mxu0
  %1203 = vmatprep.subr.bf16.mxu0 %v1137
  %1204 = vmatpush1.bf16.msra.mxu0 %v1136
  %1205 = vmatprep.subr.bf16.mxu0 %v1160
  %1206 = vmatpush1.bf16.msra.mxu0 %v1157
  %1207 = vmatprep.subr.bf16.mxu0 0
  %1208 = vmatpush1.bf16.msra.mxu0 0
  %1209 = vmatprep.subr.bf16.mxu0 0
  %1210 = vmatpush1.bf16.msra.mxu0 0
  %1211 = vmatprep.subr.bf16.mxu0 0
  %1212 = vmatpush1.bf16.msra.mxu0 0
  %1213 = vmatprep.subr.bf16.mxu0 0
  %1214 = vmatpush1.bf16.msra.mxu0 0
  %1215 = vmatprep.subr.bf16.mxu0 0
  %1216 = vmatpush1.bf16.msra.mxu0 0
  %1217 = vmatprep.subr.bf16.mxu0 0
  %1218 = vmatpush1.bf16.msra.mxu0 0
  %1219 = vmatprep.subr.bf16.mxu0 0
  %1220 = vmatpush1.bf16.msra.mxu0 0
  %1221 = vmatprep.subr.bf16.mxu0 0
  %1222 = vmatpush1.bf16.msra.mxu0 0
  %1223 = vmatprep.subr.bf16.mxu0 0
  %1224 = vmatpush1.bf16.msra.mxu0 0
  %1225 = vmatprep.subr.bf16.mxu0 0
  %1226 = vmatpush1.bf16.msra.mxu0 0
  %1227 = vmatprep.subr.bf16.mxu0 0
  %1228 = vmatpush1.bf16.msra.mxu0 0
  %1229 = vmatprep.subr.bf16.mxu0 0
  %1230 = vmatpush1.bf16.msra.mxu0 0
  %1231 = vmatprep.subr.bf16.mxu0 0
  %1232 = vmatpush1.bf16.msra.mxu0 0
  %1233 = vmatprep.subr.bf16.mxu0 0
  %1234 = vmatpush1.bf16.msra.mxu0 0
  %1235 = vmatprep.mubr.bf16.mxu0 0
  %1236 = vmatmul.mubr.bf16.gmra.mrb[0].mxu0 %v1148
  %v1237 = vpop.f32.mrb[0].mxu0
  %v1238 = vadd.f32 %v1114, %v1237
  %v1239 = vpop.f32.mrb[0].mxu0
  %v1240 = vadd.f32 %v1114, %v1239
  %v1241 = vpop.f32.mrb[0].mxu0
  %v1242 = vpop.f32.mrb[0].mxu0
  %1243 = vdwg.mxu0
  %v1244 = vmax.f32 %v1197, 0.0
  %v1245 = vmax.f32 %v1199, 0.0
  %v1246 = vmax.f32 %v1238, 0.0
  %v1247 = vmax.f32 %v1240, 0.0
  %v1248 = vmul.f32 %v1244, %v37
  %v1249 = vmul.f32 %v1245, %v38
  %v1250 = vmul.f32 %v1246, %v39
  %v1251 = vmul.f32 %v1247, %v40
  %v1252 = vadd.f32 %v1248, %v1249
  %v1253 = vadd.f32 %v1252, %v1250
  %v1254 = vadd.f32 %v1253, %v1251
  %1255 = vadd.xlane.f32.xlu0 %v1254
  %v1256 = vpop.xlane.xlu0 %1255
  %v1257 = vadd.f32 %v1244, %v1245
  %v1258 = vadd.f32 %v1257, %v1246
  %v1259 = vadd.f32 %v1258, %v1247
  %1260 = vadd.xlane.f32.xlu0 %v1259
  %v1261 = vpop.xlane.xlu0 %1260
  %v1262 = vsub.f32 %v1261, %v1256
  %v1263 = vsel %vm461, %v1256, %v1262
  %v1264 = vmul.f32 %v1263, 0.00390625
  %s1265 = scalar_lea.vmem %s3, 4
  %v1266 = vld [vmem:[%s1265] sm:$0x3]
  %v1268 = vsel %vm465, %v1266, 0
  %1270 = vmatprep.subr.mxu0 0.0
  %1271 = vmatpush1.msra.mxu0 %v1264
  %1272 = vmatprep.subr.mxu0 0.0
  %1273 = vmatpush1.msra.mxu0 0.0
  %1274 = vmatprep.subr.mxu0 0.0
  %1275 = vmatpush1.msra.mxu0 0.0
  %1276 = vmatprep.subr.mxu0 0.0
  %1277 = vmatpush1.msra.mxu0 0.0
  %1278 = vmatprep.subr.mxu0 0.0
  %1279 = vmatpush1.msra.mxu0 0.0
  %1280 = vmatprep.subr.mxu0 0.0
  %1281 = vmatpush1.msra.mxu0 0.0
  %1282 = vmatprep.subr.mxu0 0.0
  %1283 = vmatpush1.msra.mxu0 0.0
  %1284 = vmatprep.subr.mxu0 0.0
  %1285 = vmatpush1.msra.mxu0 0.0
  %1286 = vmatprep.subr.mxu0 0.0
  %1287 = vmatpush1.msra.mxu0 0.0
  %1288 = vmatprep.subr.mxu0 0.0
  %1289 = vmatpush1.msra.mxu0 0.0
  %1290 = vmatprep.subr.mxu0 0.0
  %1291 = vmatpush1.msra.mxu0 0.0
  %1292 = vmatprep.subr.mxu0 0.0
  %1293 = vmatpush1.msra.mxu0 0.0
  %1294 = vmatprep.subr.mxu0 0.0
  %1295 = vmatpush1.msra.mxu0 0.0
  %1296 = vmatprep.subr.mxu0 0.0
  %1297 = vmatpush1.msra.mxu0 0.0
  %1298 = vmatprep.subr.mxu0 0.0
  %1299 = vmatpush1.msra.mxu0 0.0
  %1300 = vmatprep.subr.mxu0 0.0
  %1301 = vmatpush1.msra.mxu0 0.0
  %1302 = vmatprep.subr.mxu0 0.0
  %1303 = vmatpush1.msra.mxu0 0.0
  %1304 = vmatprep.subr.mxu0 0.0
  %1305 = vmatpush1.msra.mxu0 0.0
  %1306 = vmatprep.subr.mxu0 0.0
  %1307 = vmatpush1.msra.mxu0 0.0
  %1308 = vmatprep.subr.mxu0 0.0
  %1309 = vmatpush1.msra.mxu0 0.0
  %1310 = vmatprep.subr.mxu0 0.0
  %1311 = vmatpush1.msra.mxu0 0.0
  %1312 = vmatprep.subr.mxu0 0.0
  %1313 = vmatpush1.msra.mxu0 0.0
  %1314 = vmatprep.subr.mxu0 0.0
  %1315 = vmatpush1.msra.mxu0 0.0
  %1316 = vmatprep.subr.mxu0 0.0
  %1317 = vmatpush1.msra.mxu0 0.0
  %1318 = vmatprep.subr.mxu0 0.0
  %1319 = vmatpush1.msra.mxu0 0.0
  %1320 = vmatprep.subr.mxu0 0.0
  %1321 = vmatpush1.msra.mxu0 0.0
  %1322 = vmatprep.subr.mxu0 0.0
  %1323 = vmatpush1.msra.mxu0 0.0
  %1324 = vmatprep.subr.mxu0 0.0
  %1325 = vmatpush1.msra.mxu0 0.0
  %1326 = vmatprep.subr.mxu0 0.0
  %1327 = vmatpush1.msra.mxu0 0.0
  %1328 = vmatprep.subr.mxu0 0.0
  %1329 = vmatpush1.msra.mxu0 0.0
  %1330 = vmatprep.subr.mxu0 0.0
  %1331 = vmatpush1.msra.mxu0 0.0
  %1332 = vmatprep.subr.mxu0 0.0
  %1333 = vmatpush1.msra.mxu0 0.0
  %1334 = vmatprep.mubr.f32.mxu0 0.0
  %1335 = vmatmul.mubr.f32.gmra.mrb[0].mxu0 %v1268
  %v1336 = vpop.f32.mrb[0].mxu0
  %v1337 = vadd.f32 0.0, %v1336
  %v1338 = vpop.f32.mrb[0].mxu0
  %1339 = vdwg.mxu0
  %v1340 = vmax.f32 %v1337, 0.0
  %s1341 = scalar_lea.vmem %s4, 16
  %v1342 = vld [vmem:[%s1341] sm:$0xff]
  %v1344 = vsel %vm541, %v1342, 0
  %v1347 = vsel %vm545, %v1340, 0
  %1349 = vmatprep.subr.mxu0 0.0
  %1350 = vmatpush1.msra.mxu0 %v1347
  %1351 = vmatprep.subr.mxu0 0.0
  %1352 = vmatpush1.msra.mxu0 0.0
  %1353 = vmatprep.subr.mxu0 0.0
  %1354 = vmatpush1.msra.mxu0 0.0
  %1355 = vmatprep.subr.mxu0 0.0
  %1356 = vmatpush1.msra.mxu0 0.0
  %1357 = vmatprep.subr.mxu0 0.0
  %1358 = vmatpush1.msra.mxu0 0.0
  %1359 = vmatprep.subr.mxu0 0.0
  %1360 = vmatpush1.msra.mxu0 0.0
  %1361 = vmatprep.subr.mxu0 0.0
  %1362 = vmatpush1.msra.mxu0 0.0
  %1363 = vmatprep.subr.mxu0 0.0
  %1364 = vmatpush1.msra.mxu0 0.0
  %1365 = vmatprep.subr.mxu0 0.0
  %1366 = vmatpush1.msra.mxu0 0.0
  %1367 = vmatprep.subr.mxu0 0.0
  %1368 = vmatpush1.msra.mxu0 0.0
  %1369 = vmatprep.subr.mxu0 0.0
  %1370 = vmatpush1.msra.mxu0 0.0
  %1371 = vmatprep.subr.mxu0 0.0
  %1372 = vmatpush1.msra.mxu0 0.0
  %1373 = vmatprep.subr.mxu0 0.0
  %1374 = vmatpush1.msra.mxu0 0.0
  %1375 = vmatprep.subr.mxu0 0.0
  %1376 = vmatpush1.msra.mxu0 0.0
  %1377 = vmatprep.subr.mxu0 0.0
  %1378 = vmatpush1.msra.mxu0 0.0
  %1379 = vmatprep.subr.mxu0 0.0
  %1380 = vmatpush1.msra.mxu0 0.0
  %1381 = vmatprep.subr.mxu0 0.0
  %1382 = vmatpush1.msra.mxu0 0.0
  %1383 = vmatprep.subr.mxu0 0.0
  %1384 = vmatpush1.msra.mxu0 0.0
  %1385 = vmatprep.subr.mxu0 0.0
  %1386 = vmatpush1.msra.mxu0 0.0
  %1387 = vmatprep.subr.mxu0 0.0
  %1388 = vmatpush1.msra.mxu0 0.0
  %1389 = vmatprep.subr.mxu0 0.0
  %1390 = vmatpush1.msra.mxu0 0.0
  %1391 = vmatprep.subr.mxu0 0.0
  %1392 = vmatpush1.msra.mxu0 0.0
  %1393 = vmatprep.subr.mxu0 0.0
  %1394 = vmatpush1.msra.mxu0 0.0
  %1395 = vmatprep.subr.mxu0 0.0
  %1396 = vmatpush1.msra.mxu0 0.0
  %1397 = vmatprep.subr.mxu0 0.0
  %1398 = vmatpush1.msra.mxu0 0.0
  %1399 = vmatprep.subr.mxu0 0.0
  %1400 = vmatpush1.msra.mxu0 0.0
  %1401 = vmatprep.subr.mxu0 0.0
  %1402 = vmatpush1.msra.mxu0 0.0
  %1403 = vmatprep.subr.mxu0 0.0
  %1404 = vmatpush1.msra.mxu0 0.0
  %1405 = vmatprep.subr.mxu0 0.0
  %1406 = vmatpush1.msra.mxu0 0.0
  %1407 = vmatprep.subr.mxu0 0.0
  %1408 = vmatpush1.msra.mxu0 0.0
  %1409 = vmatprep.subr.mxu0 0.0
  %1410 = vmatpush1.msra.mxu0 0.0
  %1411 = vmatprep.subr.mxu0 0.0
  %1412 = vmatpush1.msra.mxu0 0.0
  %1413 = vmatprep.mubr.f32.mxu0 0.0
  %1414 = vmatmul.mubr.f32.gmra.mrb[0].mxu0 %v1344
  %v1415 = vpop.f32.mrb[0].mxu0
  %v1416 = vadd.f32 0.0, %v1415
  %v1417 = vpop.f32.mrb[0].mxu0
  %1418 = vdwg.mxu0
  %v1419 = vxor.u32 %v1416, 2147483648
  %v1420 = vmul.f32 %v1419, 1.442695
  %v1421 = vpow.pop %v1420
  %v1422 = vadd.f32 %v1421, 1.0
  %v1423 = vrcp.pop %v1422
  %v1424 = vmul.f32 1.0, %v1423
  %1426 = vset.pattern.permute.xlu0 0
  %1427 = vperm.xlu0 %1426, %v1424
  %v1428 = vpop.permute.xlu0 %1427
  %v1430 = vmul.f32 %v1428, %v37
  %v1431 = vmul.f32 %v1428, %v38
  %v1432 = vmul.f32 %v1428, %v39
  %v1433 = vmul.f32 %v1428, %v40
  %1434 = vset.pattern.permute.xlu0 1
  %1435 = vperm.xlu0 %1434, %v1424
  %v1436 = vpop.permute.xlu0 %1435
  %v1438 = vmul.f32 %v1436, %v41
  %v1439 = vmul.f32 %v1436, %v42
  %v1440 = vmul.f32 %v1436, %v43
  %v1441 = vmul.f32 %v1436, %v44
  %v1442 = vadd.f32 %v1430, %v1438
  %v1443 = vadd.f32 %v1431, %v1439
  %v1444 = vadd.f32 %v1432, %v1440
  %v1445 = vadd.f32 %v1433, %v1441
  %v1446 = vmul.f32 %v1244, %v1442
  %v1447 = vmul.f32 %v1245, %v1443
  %v1448 = vmul.f32 %v1246, %v1444
  %v1449 = vmul.f32 %v1247, %v1445
  %v1450 = vpack.c.bf16 %v1446, %v1446
  %v1451 = vpack.c.bf16 %v1447, %v1447
  %v1452 = vpack.c.bf16 %v1448, %v1448
  %v1453 = vpack.c.bf16 %v1449, %v1449
  %v1458 = vunpack.c.l.b16 %v1450
  %v1459 = vunpack.c.l.b16 %v1451
  %v1460 = vunpack.c.l.b16 %v1452
  %v1461 = vunpack.c.l.b16 %v1453
  %v1462 = vpack.c.b16 %v1459, %v1458
  %v1463 = vpack.c.b16 %v1461, %v1460
  %1466 = vst [vmem:[#allocation2 + $0x40] sm:$0xff] %v1462
  %1467 = vst [vmem:[#allocation2 + $0x48] sm:$0xff] %v1463
  %v1468 = vld [vmem:[%s0] sm:$0x33]
  %v1469 = vld [vmem:[%s0 + $0x8] sm:$0x33]
  %v1470 = vunpack.c.l.bf16 %v1468
  %v1471 = vunpack.c.h.bf16 %v1468
  %v1472 = vunpack.c.l.bf16 %v1469
  %v1473 = vunpack.c.h.bf16 %v1469
  %v1474 = vmul.f32 %v1470, %v37
  %v1475 = vmul.f32 %v1471, %v38
  %v1476 = vmul.f32 %v1472, %v39
  %v1477 = vmul.f32 %v1473, %v40
  %v1478 = vsel %vm253, %v1474, 0.0
  %v1479 = vsel %vm253, %v1475, 0.0
  %v1480 = vadd.f32 %v1478, %v1479
  %v1481 = vsel %vm253, %v1476, 0.0
  %v1482 = vadd.f32 %v1480, %v1481
  %v1483 = vsel %vm253, %v1477, 0.0
  %v1484 = vadd.f32 %v1482, %v1483
  %1485 = vadd.xlane.f32.xlu0 %v1484
  %v1486 = vpop.xlane.xlu0 %1485
  %v1487 = vsel %vm253, %v1470, 0.0
  %v1488 = vsel %vm253, %v1471, 0.0
  %v1489 = vadd.f32 %v1487, %v1488
  %v1490 = vsel %vm253, %v1472, 0.0
  %v1491 = vadd.f32 %v1489, %v1490
  %v1492 = vsel %vm253, %v1473, 0.0
  %v1493 = vadd.f32 %v1491, %v1492
  %1494 = vadd.xlane.f32.xlu0 %v1493
  %v1495 = vpop.xlane.xlu0 %1494
  %v1496 = vsub.f32 %v1495, %v1486
  %v1497 = vsel %vm461, %v1486, %v1496
  %v1498 = vmul.f32 %v1497, 0.00390625
  %v1499 = vld [vmem:[%s2 + $0x10] sm:$0xf]
  %s1500 = scalar_lea.vmem %s5, 24
  %v1501 = vld [vmem:[%s1500] sm:$0xff]
  %1503 = vset.pattern.permute.xlu0 0
  %1504 = vperm.xlu0 %1503, %v1501
  %v1505 = vpop.permute.xlu0 %1504
  %vm1507 = vcmask 31744
  %v1509 = vsel %vm1507, %v1499, 0
  %v1512 = vsel %vm253, %v1498, 0
  %1514 = vmatprep.subr.mxu0 0.0
  %1515 = vmatpush1.msra.mxu0 %v1512
  %1516 = vmatprep.subr.mxu0 0.0
  %1517 = vmatpush1.msra.mxu0 0.0
  %1518 = vmatprep.subr.mxu0 0.0
  %1519 = vmatpush1.msra.mxu0 0.0
  %1520 = vmatprep.subr.mxu0 0.0
  %1521 = vmatpush1.msra.mxu0 0.0
  %1522 = vmatprep.subr.mxu0 0.0
  %1523 = vmatpush1.msra.mxu0 0.0
  %1524 = vmatprep.subr.mxu0 0.0
  %1525 = vmatpush1.msra.mxu0 0.0
  %1526 = vmatprep.subr.mxu0 0.0
  %1527 = vmatpush1.msra.mxu0 0.0
  %1528 = vmatprep.subr.mxu0 0.0
  %1529 = vmatpush1.msra.mxu0 0.0
  %1530 = vmatprep.subr.mxu0 0.0
  %1531 = vmatpush1.msra.mxu0 0.0
  %1532 = vmatprep.subr.mxu0 0.0
  %1533 = vmatpush1.msra.mxu0 0.0
  %1534 = vmatprep.subr.mxu0 0.0
  %1535 = vmatpush1.msra.mxu0 0.0
  %1536 = vmatprep.subr.mxu0 0.0
  %1537 = vmatpush1.msra.mxu0 0.0
  %1538 = vmatprep.subr.mxu0 0.0
  %1539 = vmatpush1.msra.mxu0 0.0
  %1540 = vmatprep.subr.mxu0 0.0
  %1541 = vmatpush1.msra.mxu0 0.0
  %1542 = vmatprep.subr.mxu0 0.0
  %1543 = vmatpush1.msra.mxu0 0.0
  %1544 = vmatprep.subr.mxu0 0.0
  %1545 = vmatpush1.msra.mxu0 0.0
  %1546 = vmatprep.subr.mxu0 0.0
  %1547 = vmatpush1.msra.mxu0 0.0
  %1548 = vmatprep.subr.mxu0 0.0
  %1549 = vmatpush1.msra.mxu0 0.0
  %1550 = vmatprep.subr.mxu0 0.0
  %1551 = vmatpush1.msra.mxu0 0.0
  %1552 = vmatprep.subr.mxu0 0.0
  %1553 = vmatpush1.msra.mxu0 0.0
  %1554 = vmatprep.subr.mxu0 0.0
  %1555 = vmatpush1.msra.mxu0 0.0
  %1556 = vmatprep.subr.mxu0 0.0
  %1557 = vmatpush1.msra.mxu0 0.0
  %1558 = vmatprep.subr.mxu0 0.0
  %1559 = vmatpush1.msra.mxu0 0.0
  %1560 = vmatprep.subr.mxu0 0.0
  %1561 = vmatpush1.msra.mxu0 0.0
  %1562 = vmatprep.subr.mxu0 0.0
  %1563 = vmatpush1.msra.mxu0 0.0
  %1564 = vmatprep.subr.mxu0 0.0
  %1565 = vmatpush1.msra.mxu0 0.0
  %1566 = vmatprep.subr.mxu0 0.0
  %1567 = vmatpush1.msra.mxu0 0.0
  %1568 = vmatprep.subr.mxu0 0.0
  %1569 = vmatpush1.msra.mxu0 0.0
  %1570 = vmatprep.subr.mxu0 0.0
  %1571 = vmatpush1.msra.mxu0 0.0
  %1572 = vmatprep.subr.mxu0 0.0
  %1573 = vmatpush1.msra.mxu0 0.0
  %1574 = vmatprep.subr.mxu0 0.0
  %1575 = vmatpush1.msra.mxu0 0.0
  %1576 = vmatprep.subr.mxu0 0.0
  %1577 = vmatpush1.msra.mxu0 0.0
  %1578 = vmatprep.mubr.bf16.mxu0 0
  %1579 = vmatmul.mubr.bf16.gmra.mrb[0].mxu0 %v1509
  %v1580 = vpop.f32.mrb[0].mxu0
  %v1581 = vadd.f32 %v1505, %v1580
  %v1582 = vpop.f32.mrb[0].mxu0
  %v1583 = vpop.f32.mrb[0].mxu0
  %v1584 = vpop.f32.mrb[0].mxu0
  %1585 = vdwg.mxu0
  %v1586 = vmax.f32 %v1581, 0.0
  %v1587 = vld [vmem:[%s2 + $0x14] sm:$0xf]
  %s1588 = scalar_lea.vmem %s5, 16
  %v1589 = vld [vmem:[%s1588] sm:$0xff]
  %1591 = vset.pattern.permute.xlu0 0
  %1592 = vperm.xlu0 %1591, %v1589
  %v1593 = vpop.permute.xlu0 %1592
  %v1596 = vsel %vm465, %v1587, 0
  %1598 = vmatprep.subr.mxu0 0.0
  %1599 = vmatpush1.msra.mxu0 %v1586
  %1600 = vmatprep.subr.mxu0 0.0
  %1601 = vmatpush1.msra.mxu0 0.0
  %1602 = vmatprep.subr.mxu0 0.0
  %1603 = vmatpush1.msra.mxu0 0.0
  %1604 = vmatprep.subr.mxu0 0.0
  %1605 = vmatpush1.msra.mxu0 0.0
  %1606 = vmatprep.subr.mxu0 0.0
  %1607 = vmatpush1.msra.mxu0 0.0
  %1608 = vmatprep.subr.mxu0 0.0
  %1609 = vmatpush1.msra.mxu0 0.0
  %1610 = vmatprep.subr.mxu0 0.0
  %1611 = vmatpush1.msra.mxu0 0.0
  %1612 = vmatprep.subr.mxu0 0.0
  %1613 = vmatpush1.msra.mxu0 0.0
  %1614 = vmatprep.subr.mxu0 0.0
  %1615 = vmatpush1.msra.mxu0 0.0
  %1616 = vmatprep.subr.mxu0 0.0
  %1617 = vmatpush1.msra.mxu0 0.0
  %1618 = vmatprep.subr.mxu0 0.0
  %1619 = vmatpush1.msra.mxu0 0.0
  %1620 = vmatprep.subr.mxu0 0.0
  %1621 = vmatpush1.msra.mxu0 0.0
  %1622 = vmatprep.subr.mxu0 0.0
  %1623 = vmatpush1.msra.mxu0 0.0
  %1624 = vmatprep.subr.mxu0 0.0
  %1625 = vmatpush1.msra.mxu0 0.0
  %1626 = vmatprep.subr.mxu0 0.0
  %1627 = vmatpush1.msra.mxu0 0.0
  %1628 = vmatprep.subr.mxu0 0.0
  %1629 = vmatpush1.msra.mxu0 0.0
  %1630 = vmatprep.subr.mxu0 0.0
  %1631 = vmatpush1.msra.mxu0 0.0
  %1632 = vmatprep.subr.mxu0 0.0
  %1633 = vmatpush1.msra.mxu0 0.0
  %1634 = vmatprep.subr.mxu0 0.0
  %1635 = vmatpush1.msra.mxu0 0.0
  %1636 = vmatprep.subr.mxu0 0.0
  %1637 = vmatpush1.msra.mxu0 0.0
  %1638 = vmatprep.subr.mxu0 0.0
  %1639 = vmatpush1.msra.mxu0 0.0
  %1640 = vmatprep.subr.mxu0 0.0
  %1641 = vmatpush1.msra.mxu0 0.0
  %1642 = vmatprep.subr.mxu0 0.0
  %1643 = vmatpush1.msra.mxu0 0.0
  %1644 = vmatprep.subr.mxu0 0.0
  %1645 = vmatpush1.msra.mxu0 0.0
  %1646 = vmatprep.subr.mxu0 0.0
  %1647 = vmatpush1.msra.mxu0 0.0
  %1648 = vmatprep.subr.mxu0 0.0
  %1649 = vmatpush1.msra.mxu0 0.0
  %1650 = vmatprep.subr.mxu0 0.0
  %1651 = vmatpush1.msra.mxu0 0.0
  %1652 = vmatprep.subr.mxu0 0.0
  %1653 = vmatpush1.msra.mxu0 0.0
  %1654 = vmatprep.subr.mxu0 0.0
  %1655 = vmatpush1.msra.mxu0 0.0
  %1656 = vmatprep.subr.mxu0 0.0
  %1657 = vmatpush1.msra.mxu0 0.0
  %1658 = vmatprep.subr.mxu0 0.0
  %1659 = vmatpush1.msra.mxu0 0.0
  %1660 = vmatprep.subr.mxu0 0.0
  %1661 = vmatpush1.msra.mxu0 0.0
  %1662 = vmatprep.mubr.bf16.mxu0 0
  %1663 = vmatmul.mubr.bf16.gmra.mrb[0].mxu0 %v1596
  %v1664 = vpop.f32.mrb[0].mxu0
  %v1665 = vadd.f32 %v1593, %v1664
  %v1666 = vpop.f32.mrb[0].mxu0
  %v1667 = vpop.f32.mrb[0].mxu0
  %v1668 = vpop.f32.mrb[0].mxu0
  %1669 = vdwg.mxu0
  %v1670 = vld [vmem:[%s2 + $0x4] sm:$0xf]
  %v1671 = vld [vmem:[#allocation2] sm:$0xff]
  %v1672 = vld [vmem:[#allocation2 + $0x8] sm:$0xff]
  %v1673 = vld [vmem:[#allocation2 + $0x10] sm:$0xff]
  %v1674 = vld [vmem:[#allocation2 + $0x18] sm:$0xff]
  %v1675 = vld [vmem:[#allocation2 + $0x20] sm:$0xff]
  %v1676 = vld [vmem:[#allocation2 + $0x28] sm:$0xff]
  %v1677 = vld [vmem:[#allocation2 + $0x30] sm:$0xff]
  %v1678 = vld [vmem:[#allocation2 + $0x38] sm:$0xff]
  %v1679 = vld [vmem:[#allocation2 + $0x40] sm:$0xff]
  %v1680 = vld [vmem:[#allocation2 + $0x48] sm:$0xff]
  %1682 = vset.pattern.permute.xlu0 0
  %1683 = vperm.xlu0 %1682, %v1665
  %v1684 = vpop.permute.xlu0 %1683
  %v1686 = vmul.f32 %v1684, %v37
  %v1687 = vmul.f32 %v1684, %v38
  %v1688 = vmul.f32 %v1684, %v39
  %v1689 = vmul.f32 %v1684, %v40
  %1690 = vset.pattern.permute.xlu0 1
  %1691 = vperm.xlu0 %1690, %v1665
  %v1692 = vpop.permute.xlu0 %1691
  %v1694 = vmul.f32 %v1692, %v41
  %v1695 = vmul.f32 %v1692, %v42
  %v1696 = vmul.f32 %v1692, %v43
  %v1697 = vmul.f32 %v1692, %v44
  %v1698 = vadd.f32 %v1686, %v1694
  %v1699 = vadd.f32 %v1687, %v1695
  %v1700 = vadd.f32 %v1688, %v1696
  %v1701 = vadd.f32 %v1689, %v1697
  %v1712 = vunpack.c.l.b16 %v1671
  %v1713 = vunpack.c.h.b16 %v1671
  %v1714 = vunpack.c.l.b16 %v1672
  %v1715 = vunpack.c.h.b16 %v1672
  %v1716 = vunpack.c.l.b16 %v1673
  %v1717 = vunpack.c.h.b16 %v1673
  %v1718 = vunpack.c.l.b16 %v1674
  %v1719 = vunpack.c.h.b16 %v1674
  %v1720 = vunpack.c.l.b16 %v1675
  %v1721 = vunpack.c.h.b16 %v1675
  %v1722 = vunpack.c.l.b16 %v1676
  %v1723 = vunpack.c.h.b16 %v1676
  %v1724 = vunpack.c.l.b16 %v1677
  %v1725 = vunpack.c.h.b16 %v1677
  %v1726 = vunpack.c.l.b16 %v1678
  %v1727 = vunpack.c.h.b16 %v1678
  %v1728 = vunpack.c.l.b16 %v1679
  %v1729 = vunpack.c.h.b16 %v1679
  %v1730 = vunpack.c.l.b16 %v1680
  %v1731 = vunpack.c.h.b16 %v1680
  %v1732 = vpack.c.b16 %v1716, %v1712
  %v1733 = vpack.c.b16 %v1717, %v1713
  %v1734 = vpack.c.b16 %v1718, %v1714
  %v1735 = vpack.c.b16 %v1719, %v1715
  %v1736 = vpack.c.b16 %v1724, %v1720
  %v1737 = vpack.c.b16 %v1725, %v1721
  %v1738 = vpack.c.b16 %v1726, %v1722
  %v1739 = vpack.c.b16 %v1727, %v1723
  %v1740 = vpack.c.b16 %v1728, %v1728
  %v1741 = vpack.c.b16 %v1729, %v1729
  %v1742 = vpack.c.b16 %v1730, %v1730
  %v1743 = vpack.c.b16 %v1731, %v1731
  %vm1752 = vcmask 326656
  %v1754 = vsel %vm1752, %v1670, 0
  %v1757 = vsel %vm253, %v1740, 0
  %v1760 = vsel %vm253, %v1741, 0
  %v1763 = vsel %vm253, %v1742, 0
  %v1766 = vsel %vm253, %v1743, 0
  %1768 = vmatprep.subr.bf16.mxu0 %v1733
  %1769 = vmatpush1.bf16.msra.mxu0 %v1732
  %1770 = vmatprep.subr.bf16.mxu0 %v1737
  %1771 = vmatpush1.bf16.msra.mxu0 %v1736
  %1772 = vmatprep.subr.bf16.mxu0 %v1760
  %1773 = vmatpush1.bf16.msra.mxu0 %v1757
  %1774 = vmatprep.subr.bf16.mxu0 0
  %1775 = vmatpush1.bf16.msra.mxu0 0
  %1776 = vmatprep.subr.bf16.mxu0 0
  %1777 = vmatpush1.bf16.msra.mxu0 0
  %1778 = vmatprep.subr.bf16.mxu0 0
  %1779 = vmatpush1.bf16.msra.mxu0 0
  %1780 = vmatprep.subr.bf16.mxu0 0
  %1781 = vmatpush1.bf16.msra.mxu0 0
  %1782 = vmatprep.subr.bf16.mxu0 0
  %1783 = vmatpush1.bf16.msra.mxu0 0
  %1784 = vmatprep.subr.bf16.mxu0 0
  %1785 = vmatpush1.bf16.msra.mxu0 0
  %1786 = vmatprep.subr.bf16.mxu0 0
  %1787 = vmatpush1.bf16.msra.mxu0 0
  %1788 = vmatprep.subr.bf16.mxu0 0
  %1789 = vmatpush1.bf16.msra.mxu0 0
  %1790 = vmatprep.subr.bf16.mxu0 0
  %1791 = vmatpush1.bf16.msra.mxu0 0
  %1792 = vmatprep.subr.bf16.mxu0 0
  %1793 = vmatpush1.bf16.msra.mxu0 0
  %1794 = vmatprep.subr.bf16.mxu0 0
  %1795 = vmatpush1.bf16.msra.mxu0 0
  %1796 = vmatprep.subr.bf16.mxu0 0
  %1797 = vmatpush1.bf16.msra.mxu0 0
  %1798 = vmatprep.subr.bf16.mxu0 0
  %1799 = vmatpush1.bf16.msra.mxu0 0
  %1800 = vmatprep.mubr.bf16.mxu0 0
  %1801 = vmatmul.mubr.bf16.gmra.mrb[0].mxu0 %v1754
  %v1802 = vpop.f32.mrb[0].mxu0
  %v1803 = vadd.f32 %v1698, %v1802
  %v1804 = vpop.f32.mrb[0].mxu0
  %v1805 = vadd.f32 %v1699, %v1804
  %v1806 = vpop.f32.mrb[0].mxu0
  %v1807 = vpop.f32.mrb[0].mxu0
  %1808 = vdwg.mxu0
  %1809 = vmatprep.subr.bf16.mxu0 %v1735
  %1810 = vmatpush1.bf16.msra.mxu0 %v1734
  %1811 = vmatprep.subr.bf16.mxu0 %v1739
  %1812 = vmatpush1.bf16.msra.mxu0 %v1738
  %1813 = vmatprep.subr.bf16.mxu0 %v1766
  %1814 = vmatpush1.bf16.msra.mxu0 %v1763
  %1815 = vmatprep.subr.bf16.mxu0 0
  %1816 = vmatpush1.bf16.msra.mxu0 0
  %1817 = vmatprep.subr.bf16.mxu0 0
  %1818 = vmatpush1.bf16.msra.mxu0 0
  %1819 = vmatprep.subr.bf16.mxu0 0
  %1820 = vmatpush1.bf16.msra.mxu0 0
  %1821 = vmatprep.subr.bf16.mxu0 0
  %1822 = vmatpush1.bf16.msra.mxu0 0
  %1823 = vmatprep.subr.bf16.mxu0 0
  %1824 = vmatpush1.bf16.msra.mxu0 0
  %1825 = vmatprep.subr.bf16.mxu0 0
  %1826 = vmatpush1.bf16.msra.mxu0 0
  %1827 = vmatprep.subr.bf16.mxu0 0
  %1828 = vmatpush1.bf16.msra.mxu0 0
  %1829 = vmatprep.subr.bf16.mxu0 0
  %1830 = vmatpush1.bf16.msra.mxu0 0
  %1831 = vmatprep.subr.bf16.mxu0 0
  %1832 = vmatpush1.bf16.msra.mxu0 0
  %1833 = vmatprep.subr.bf16.mxu0 0
  %1834 = vmatpush1.bf16.msra.mxu0 0
  %1835 = vmatprep.subr.bf16.mxu0 0
  %1836 = vmatpush1.bf16.msra.mxu0 0
  %1837 = vmatprep.subr.bf16.mxu0 0
  %1838 = vmatpush1.bf16.msra.mxu0 0
  %1839 = vmatprep.subr.bf16.mxu0 0
  %1840 = vmatpush1.bf16.msra.mxu0 0
  %1841 = vmatprep.mubr.bf16.mxu0 0
  %1842 = vmatmul.mubr.bf16.gmra.mrb[0].mxu0 %v1754
  %v1843 = vpop.f32.mrb[0].mxu0
  %v1844 = vadd.f32 %v1700, %v1843
  %v1845 = vpop.f32.mrb[0].mxu0
  %v1846 = vadd.f32 %v1701, %v1845
  %v1847 = vpop.f32.mrb[0].mxu0
  %v1848 = vpop.f32.mrb[0].mxu0
  %1849 = vdwg.mxu0
  %v1850 = vmax.f32 %v1803, 0.0
  %v1851 = vmax.f32 %v1805, 0.0
  %v1852 = vmax.f32 %v1844, 0.0
  %v1853 = vmax.f32 %v1846, 0.0
  %v1854 = vadd.f32 %v1850, %v404
  %v1855 = vadd.f32 %v1851, %v405
  %v1856 = vadd.f32 %v1852, %v406
  %v1857 = vadd.f32 %v1853, %v407
  %1858 = vst [vmem:[%s6] sm:$0xff] %v1854
  %1859 = vst [vmem:[%s6 + $0x8] sm:$0xff] %v1855
  %1860 = vst [vmem:[%s6 + $0x10] sm:$0xff] %v1856
  %1861 = vst [vmem:[%s6 + $0x18] sm:$0xff] %v1857
  // Predicated region
  $region26: #{hfsm_forward.1} parent=0 // pred_check
    _
  $region27: #{hfsm_forward.1} parent=0 // pred_check_branch
    %1863 = sbr.rel (0) target = $region29
  $region28: #{hfsm_forward.1} parent=0 // pred_region
    _
  $region29: #{hfsm_forward.1} parent=0 // pred_fallthru
    _
  // Predicated region
  $region30: #{hfsm_forward.1} parent=0 // pred_check
    _
  $region31: #{hfsm_forward.1} parent=0 // pred_check_branch
    %1865 = sbr.rel (0) target = $region33
  $region32: #{hfsm_forward.1} parent=0 // pred_region
    _
  $region33: #{hfsm_forward.1} parent=0 // pred_fallthru
    _

</llo_original>
